<compile_context>
chip_gen: v5e
topology: v5e:2x2
jax: 0.10.0
libtpu: 0.0.40
codegen_flags: <defaults>
</compile_context>

<pallas_src>
import math

import jax
import jax.numpy as jnp
from jax.experimental import pallas as pl
from jax.experimental.pallas import tpu as pltpu  # noqa: F401  (kept per template)

# ---------------- small, self-consistent ViT config ----------------
B = 2            # batch
C = 3            # image channels
IMG = 16         # image height = width
P = 4            # patch size
D = 32           # hidden size
H = 2            # attention heads
DH = D // H      # head dim
MLP = 4 * D      # intermediate (MLP) size
L = 2            # number of encoder layers
NCLS = 10        # classifier classes
NPATCH = (IMG // P) ** 2
S = NPATCH + 1   # sequence length (CLS + patches)
CPP = C * P * P  # flattened patch length
HEAD_PAD = 128   # lane-dense classifier width (sliced to NCLS outside)
EPS = 1e-12      # HF ViT layer_norm_eps


# ---------------- shared math helpers (used by kernel and reference) ----------
def _layernorm(x, g, b):
    mu = jnp.mean(x, axis=-1, keepdims=True)
    xc = x - mu
    var = jnp.mean(xc * xc, axis=-1, keepdims=True)
    return xc * jax.lax.rsqrt(var + EPS) * g + b


def _gelu(x):
    # TODO(synk): HF ViT uses exact (erf) GELU; tanh approximation kept for
    # guaranteed Mosaic lowering (numerically ~1e-3 close).
    return jax.nn.gelu(x, approximate=True)


# ---------------- single fused Pallas kernel ----------------
def fused_vit_kernel(
    patches_ref,          # (B*S, CPP)  zero row at every CLS position
    pw_ref, pb_ref,       # (CPP, D), (1, D)       patch-embed weight / bias
    pos_ref,              # (B*S, D)   pos embedding tiled over B; CLS rows
                          #            already hold cls_token + pos[0] - pb
    bias_ref,             # (B*S, B*S) block-diagonal 0 / -1e30 attention bias
    wqkv_ref, bqkv_ref,   # (L, D, 3D), (L, 1, 3D)  fused QKV
    wo_ref,               # (L, D, D)               attention output proj
    lnvec_ref,            # (L, 8, D): ln1_g, ln1_b, ln2_g, ln2_b, bo, b_mlp2, 0, 0
    w1_ref, b1_ref,       # (L, D, MLP), (L, 1, MLP)
    w2_ref,               # (L, MLP, D)
    lnf_ref,              # (2, D): final LN gamma, beta
    wc_ref, bc_ref,       # (D, HEAD_PAD), (1, HEAD_PAD)  zero-padded classifier
    o_ref,                # (B*S, HEAD_PAD)  lane-dense logits for every token
):
    f32 = jnp.float32

    # ---- patch embedding + CLS token + position embedding, flat (B*S, D) ----
    # CLS rows of `patches` are zero, so their spurious +patch_b is cancelled
    # by the -patch_b folded into pos_ref row 0 (exact to ~1 ulp).
    x = (jnp.dot(patches_ref[...], pw_ref[...], preferred_element_type=f32)
         + pb_ref[...] + pos_ref[...])

    attn_bias = bias_ref[...]                       # hoisted: reused by all layers/heads
    scale = 1.0 / math.sqrt(DH)

    for l in range(L):                              # static layer loop (L = 2)
        vec = lnvec_ref[l]                          # (8, D) packed LN params / biases
        wo_l = wo_ref[l]                            # (D, D)

        # --- LayerNorm1 + fused QKV projection over all B*S rows ---
        ln1 = _layernorm(x, vec[0:1, :], vec[1:2, :])
        qkv = (jnp.dot(ln1, wqkv_ref[l], preferred_element_type=f32)
               + bqkv_ref[l])                       # (B*S, 3D)

        # --- multi-head self-attention, batched over B via block-diag bias ---
        attn = None
        for h in range(H):                          # static head loop (H = 2)
            qh = qkv[:, 0 * D + h * DH: 0 * D + (h + 1) * DH]
            kh = qkv[:, 1 * D + h * DH: 1 * D + (h + 1) * DH]
            vh = qkv[:, 2 * D + h * DH: 2 * D + (h + 1) * DH]
            scores = jax.lax.dot_general(
                qh, kh, (((1,), (1,)), ((), ())),
                preferred_element_type=f32) * scale + attn_bias     # (B*S, B*S)
            probs = jax.nn.softmax(scores, axis=-1)                 # cross-batch -> exactly 0
            ctx = jnp.dot(probs, vh, preferred_element_type=f32)    # (B*S, DH)
            # concat-over-heads @ Wo == sum_h ctx_h @ Wo[h*DH:(h+1)*DH, :]
            contrib = jnp.dot(ctx, wo_l[h * DH:(h + 1) * DH, :],
                              preferred_element_type=f32)
            attn = contrib if attn is None else attn + contrib
        x = x + attn + vec[4:5, :]                  # residual 1 (+ Wo bias)

        # --- LayerNorm2 + MLP ---
        ln2 = _layernorm(x, vec[2:3, :], vec[3:4, :])
        hmid = jnp.dot(ln2, w1_ref[l], preferred_element_type=f32) + b1_ref[l]
        mo = (jnp.dot(_gelu(hmid), w2_ref[l], preferred_element_type=f32)
              + vec[5:6, :])
        x = x + mo                                  # residual 2

    # ---- final LayerNorm (per-token) + lane-dense padded classifier ----
    lnf = lnf_ref[...]
    xn = _layernorm(x, lnf[0:1, :], lnf[1:2, :])
    o_ref[...] = (jnp.dot(xn, wc_ref[...], preferred_element_type=f32)
                  + bc_ref[...])


# ---------------- wrapper: one pallas_call for the whole forward ----------------
def segmented_vit_forward(pixel_values, pk):
    # im2col: (B, C, H, W) -> (B, N, C*P*P) row-major over the patch grid,
    # with one zero row prepended per image at the CLS position -> (B*S, CPP).
    x = pixel_values.reshape(B, C, IMG // P, P, IMG // P, P)
    x = x.transpose(0, 2, 4, 1, 3, 5).reshape(B, NPATCH, CPP)
    x = jnp.concatenate([jnp.zeros((B, 1, CPP), jnp.float32), x], axis=1)
    patches = x.reshape(B * S, CPP)

    logits_all = pl.pallas_call(
        fused_vit_kernel,
        out_shape=jax.ShapeDtypeStruct((B * S, HEAD_PAD), jnp.float32),
    )(
        patches, pk["patch_w"], pk["patch_b"], pk["pos_tiled"], pk["attn_bias"],
        pk["wqkv"], pk["bqkv"], pk["wo"], pk["lnvec"],
        pk["w1"], pk["b1"], pk["w2"],
        pk["lnf"], pk["head_w"], pk["head_b"],
    )
    # CLS-token rows are at positions 0, S, 2S, ...; first NCLS lanes are real.
    return logits_all.reshape(B, S, HEAD_PAD)[:, 0, :NCLS]


# ---------------- parameters (deterministic synthetic init) ----------------
def _dense(key, fan_in, fan_out):
    kw, kb = jax.random.split(key)
    w = 0.02 * jax.random.normal(kw, (fan_in, fan_out), jnp.float32)
    b = 0.02 * jax.random.normal(kb, (1, fan_out), jnp.float32)
    return w, b


def init_params(key):
    keys = iter(jax.random.split(key, 8 + 8 * L))
    params = {}
    # patch embedding (conv weight (D,C,P,P) flattened to (C*P*P, D))
    params["patch_w"], params["patch_b"] = _dense(next(keys), CPP, D)
    params["cls_token"] = 0.02 * jax.random.normal(next(keys), (1, 1, D), jnp.float32)
    params["pos_embed"] = 0.02 * jax.random.normal(next(keys), (1, S, D), jnp.float32)
    blocks = []
    for _ in range(L):
        blk = {
            "ln1_g": jnp.ones((1, D), jnp.float32),
            "ln1_b": jnp.zeros((1, D), jnp.float32),
            "ln2_g": jnp.ones((1, D), jnp.float32),
            "ln2_b": jnp.zeros((1, D), jnp.float32),
        }
        blk["wq"], blk["bq"] = _dense(next(keys), D, D)
        blk["wk"], blk["bk"] = _dense(next(keys), D, D)
        blk["wv"], blk["bv"] = _dense(next(keys), D, D)
        blk["wo"], blk["bo"] = _dense(next(keys), D, D)
        blk["w1"], blk["b1"] = _dense(next(keys), D, MLP)
        blk["w2"], blk["b2"] = _dense(next(keys), MLP, D)
        blocks.append(blk)
    params["blocks"] = blocks
    params["ln_g"] = jnp.ones((1, D), jnp.float32)
    params["ln_b"] = jnp.zeros((1, D), jnp.float32)
    params["cls_w"], params["cls_b"] = _dense(next(keys), D, NCLS)
    return params


def pack_params(params):
    """Pack the per-block parameter dicts into the fused kernel's layout."""
    blocks = params["blocks"]
    wqkv = jnp.stack([jnp.concatenate([b["wq"], b["wk"], b["wv"]], axis=1)
                      for b in blocks])                                   # (L, D, 3D)
    bqkv = jnp.stack([jnp.concatenate([b["bq"], b["bk"], b["bv"]], axis=1)
                      for b in blocks])                                   # (L, 1, 3D)
    wo = jnp.stack([b["wo"] for b in blocks])                             # (L, D, D)
    lnvec = jnp.stack([
        jnp.concatenate([b["ln1_g"], b["ln1_b"], b["ln2_g"], b["ln2_b"],
                         b["bo"], b["b2"], jnp.zeros((2, D), jnp.float32)], axis=0)
        for b in blocks])                                                 # (L, 8, D)
    w1 = jnp.stack([b["w1"] for b in blocks])                             # (L, D, MLP)
    b1 = jnp.stack([b["b1"] for b in blocks])                             # (L, 1, MLP)
    w2 = jnp.stack([b["w2"] for b in blocks])                             # (L, MLP, D)

    # position embedding folded with the CLS token and patch bias, so the zero
    # "CLS rows" of the augmented patch matrix come out as cls_token + pos[0].
    pos = params["pos_embed"][0]                                          # (S, D)
    row0 = params["cls_token"][0] + pos[0:1, :] - params["patch_b"]
    pos_adj = jnp.concatenate([row0, pos[1:, :]], axis=0)                 # (S, D)
    pos_tiled = jnp.tile(pos_adj, (B, 1))                                 # (B*S, D)

    # block-diagonal additive attention bias (0 within an image, -1e30 across)
    rb = jnp.arange(B * S) // S
    attn_bias = jnp.where(rb[:, None] == rb[None, :], 0.0, -1e30).astype(jnp.float32)

    # lane-dense classifier: pad to 128 output lanes (sliced in the wrapper)
    head_w = jnp.zeros((D, HEAD_PAD), jnp.float32).at[:, :NCLS].set(params["cls_w"])
    head_b = jnp.zeros((1, HEAD_PAD), jnp.float32).at[:, :NCLS].set(params["cls_b"])
    lnf = jnp.concatenate([params["ln_g"], params["ln_b"]], axis=0)       # (2, D)

    return dict(patch_w=params["patch_w"], patch_b=params["patch_b"],
                pos_tiled=pos_tiled, attn_bias=attn_bias,
                wqkv=wqkv, bqkv=bqkv, wo=wo, lnvec=lnvec,
                w1=w1, b1=b1, w2=w2,
                lnf=lnf, head_w=head_w, head_b=head_b)


# ---------------- pure-JAX reference (same math, unpacked params) ----------------
def reference_forward(pixel_values, params):
    x = pixel_values.reshape(B, C, IMG // P, P, IMG // P, P)
    x = x.transpose(0, 2, 4, 1, 3, 5).reshape(B, NPATCH, CPP)
    pe = x @ params["patch_w"] + params["patch_b"]
    cls = jnp.broadcast_to(params["cls_token"], (B, 1, D))
    h = jnp.concatenate([cls, pe], axis=1) + params["pos_embed"]
    for blk in params["blocks"]:
        ln1 = _layernorm(h, blk["ln1_g"], blk["ln1_b"])
        q = (ln1 @ blk["wq"] + blk["bq"]).reshape(B, S, H, DH).transpose(0, 2, 1, 3)
        k = (ln1 @ blk["wk"] + blk["bk"]).reshape(B, S, H, DH).transpose(0, 2, 1, 3)
        v = (ln1 @ blk["wv"] + blk["bv"]).reshape(B, S, H, DH).transpose(0, 2, 1, 3)
        att = jax.nn.softmax((q @ k.transpose(0, 1, 3, 2)) / math.sqrt(DH), axis=-1)
        ctx = (att @ v).transpose(0, 2, 1, 3).reshape(B, S, D)
        h = h + (ctx @ blk["wo"] + blk["bo"])
        ln2 = _layernorm(h, blk["ln2_g"], blk["ln2_b"])
        h = h + (_gelu(ln2 @ blk["w1"] + blk["b1"]) @ blk["w2"] + blk["b2"])
    hn = _layernorm(h, params["ln_g"], params["ln_b"])
    return hn[:, 0] @ params["cls_w"] + params["cls_b"]


if __name__ == "__main__":
    key = jax.random.PRNGKey(0)
    k_x, k_p = jax.random.split(key)
    pixel_values = jax.random.normal(k_x, (B, C, IMG, IMG), jnp.float32)
    params = init_params(k_p)
    packed = pack_params(params)             # packed once, outside jit

    fwd = jax.jit(segmented_vit_forward)
    logits = fwd(pixel_values, packed)
    jax.block_until_ready(logits)
    assert logits.shape == (B, NCLS) and logits.dtype == jnp.float32

    # numerical sanity check against a pure-JAX reference of the same math
    ref = reference_forward(pixel_values, params)
    max_err = float(jnp.max(jnp.abs(logits - ref)))
    assert jnp.allclose(logits, ref, rtol=2e-2, atol=5e-3), f"max_err={max_err}"

    print("KERNEL_OK")
</pallas_src>

<mosaic_0001>
module attributes {stable_mosaic.version = 11 : i64} {
  func.func @fused_vit_kernel(%arg0: memref<34x48xf32, #tpu.memory_space<vmem>>, %arg1: memref<48x32xf32, #tpu.memory_space<vmem>>, %arg2: memref<1x32xf32, #tpu.memory_space<vmem>>, %arg3: memref<34x32xf32, #tpu.memory_space<vmem>>, %arg4: memref<34x34xf32, #tpu.memory_space<vmem>>, %arg5: memref<2x32x96xf32, #tpu.memory_space<vmem>>, %arg6: memref<2x1x96xf32, #tpu.memory_space<vmem>>, %arg7: memref<2x32x32xf32, #tpu.memory_space<vmem>>, %arg8: memref<2x8x32xf32, #tpu.memory_space<vmem>>, %arg9: memref<2x32x128xf32, #tpu.memory_space<vmem>>, %arg10: memref<2x1x128xf32, #tpu.memory_space<vmem>>, %arg11: memref<2x128x32xf32, #tpu.memory_space<vmem>>, %arg12: memref<2x32xf32, #tpu.memory_space<vmem>>, %arg13: memref<32x128xf32, #tpu.memory_space<vmem>>, %arg14: memref<1x128xf32, #tpu.memory_space<vmem>>, %arg15: memref<34x128xf32, #tpu.memory_space<vmem>>) attributes {dimension_semantics = [], scalar_prefetch = 0 : i64, scratch_operands = 0 : i64, tpu.core_type = #tpu.core_type<tc>} {
    %c0 = arith.constant 0 : index
    %c0_0 = arith.constant 0 : index
    %0 = vector.load %arg0[%c0, %c0_0] : memref<34x48xf32, #tpu.memory_space<vmem>>, vector<34x48xf32>
    %c0_1 = arith.constant 0 : index
    %c0_2 = arith.constant 0 : index
    %1 = vector.load %arg1[%c0_1, %c0_2] : memref<48x32xf32, #tpu.memory_space<vmem>>, vector<48x32xf32>
    %cst = arith.constant dense<0.000000e+00> : vector<34x32xf32>
    %2 = tpu.matmul %0, %1, %cst {dimension_numbers = #tpu.dot_dimension_numbers<[1], [0], [0], [1], [0, 0, 1, 1], [], []>} : vector<34x48xf32>, vector<48x32xf32>, vector<34x32xf32> -> vector<34x32xf32>
    %c0_3 = arith.constant 0 : index
    %c0_4 = arith.constant 0 : index
    %3 = vector.load %arg2[%c0_3, %c0_4] : memref<1x32xf32, #tpu.memory_space<vmem>>, vector<1x32xf32>
    %4 = vector.broadcast %3 : vector<1x32xf32> to vector<34x32xf32>
    %5 = arith.addf %2, %4 : vector<34x32xf32>
    %c0_5 = arith.constant 0 : index
    %c0_6 = arith.constant 0 : index
    %6 = vector.load %arg3[%c0_5, %c0_6] : memref<34x32xf32, #tpu.memory_space<vmem>>, vector<34x32xf32>
    %7 = arith.addf %5, %6 : vector<34x32xf32>
    %c0_7 = arith.constant 0 : index
    %c0_8 = arith.constant 0 : index
    %8 = vector.load %arg4[%c0_7, %c0_8] : memref<34x34xf32, #tpu.memory_space<vmem>>, vector<34x34xf32>
    %c0_9 = arith.constant 0 : index
    %c0_10 = arith.constant 0 : index
    %c0_11 = arith.constant 0 : index
    %9 = vector.load %arg8[%c0_9, %c0_10, %c0_11] : memref<2x8x32xf32, #tpu.memory_space<vmem>>, vector<1x8x32xf32>
    %10 = vector.shape_cast %9 : vector<1x8x32xf32> to vector<8x32xf32>
    %c0_12 = arith.constant 0 : index
    %c0_13 = arith.constant 0 : index
    %c0_14 = arith.constant 0 : index
    %11 = vector.load %arg7[%c0_12, %c0_13, %c0_14] : memref<2x32x32xf32, #tpu.memory_space<vmem>>, vector<1x32x32xf32>
    %12 = vector.shape_cast %11 : vector<1x32x32xf32> to vector<32x32xf32>
    %13 = vector.extract_strided_slice %10 {offsets = [0, 0], sizes = [1, 32], strides = [1, 1]} : vector<8x32xf32> to vector<1x32xf32>
    %14 = vector.extract_strided_slice %10 {offsets = [1, 0], sizes = [1, 32], strides = [1, 1]} : vector<8x32xf32> to vector<1x32xf32>
    %cst_15 = arith.constant dense<0.000000e+00> : vector<34xf32>
    %15 = vector.multi_reduction <add>, %7, %cst_15 [1] : vector<34x32xf32> to vector<34xf32>
    %16 = vector.shape_cast %15 : vector<34xf32> to vector<34x1xf32>
    %cst_16 = arith.constant 3.200000e+01 : f32
    %17 = vector.broadcast %cst_16 : f32 to vector<34x1xf32>
    %18 = arith.divf %16, %17 : vector<34x1xf32>
    %19 = vector.broadcast %18 : vector<34x1xf32> to vector<34x32xf32>
    %20 = arith.subf %7, %19 : vector<34x32xf32>
    %21 = arith.mulf %20, %20 : vector<34x32xf32>
    %cst_17 = arith.constant dense<0.000000e+00> : vector<34xf32>
    %22 = vector.multi_reduction <add>, %21, %cst_17 [1] : vector<34x32xf32> to vector<34xf32>
    %23 = vector.shape_cast %22 : vector<34xf32> to vector<34x1xf32>
    %cst_18 = arith.constant 3.200000e+01 : f32
    %24 = vector.broadcast %cst_18 : f32 to vector<34x1xf32>
    %25 = arith.divf %23, %24 : vector<34x1xf32>
    %cst_19 = arith.constant 9.99999996E-13 : f32
    %26 = vector.broadcast %cst_19 : f32 to vector<34x1xf32>
    %27 = arith.addf %25, %26 : vector<34x1xf32>
    %28 = math.rsqrt %27 : vector<34x1xf32>
    %29 = vector.broadcast %28 : vector<34x1xf32> to vector<34x32xf32>
    %30 = arith.mulf %20, %29 : vector<34x32xf32>
    %31 = vector.broadcast %13 : vector<1x32xf32> to vector<34x32xf32>
    %32 = arith.mulf %30, %31 : vector<34x32xf32>
    %33 = vector.broadcast %14 : vector<1x32xf32> to vector<34x32xf32>
    %34 = arith.addf %32, %33 : vector<34x32xf32>
    %c0_20 = arith.constant 0 : index
    %c0_21 = arith.constant 0 : index
    %c0_22 = arith.constant 0 : index
    %35 = vector.load %arg5[%c0_20, %c0_21, %c0_22] : memref<2x32x96xf32, #tpu.memory_space<vmem>>, vector<1x32x96xf32>
    %36 = vector.shape_cast %35 : vector<1x32x96xf32> to vector<32x96xf32>
    %cst_23 = arith.constant dense<0.000000e+00> : vector<34x96xf32>
    %37 = tpu.matmul %34, %36, %cst_23 {dimension_numbers = #tpu.dot_dimension_numbers<[1], [0], [0], [1], [0, 0, 1, 1], [], []>} : vector<34x32xf32>, vector<32x96xf32>, vector<34x96xf32> -> vector<34x96xf32>
    %c0_24 = arith.constant 0 : index
    %c0_25 = arith.constant 0 : index
    %c0_26 = arith.constant 0 : index
    %38 = vector.load %arg6[%c0_24, %c0_25, %c0_26] : memref<2x1x96xf32, #tpu.memory_space<vmem>>, vector<1x1x96xf32>
    %39 = vector.shape_cast %38 : vector<1x1x96xf32> to vector<1x96xf32>
    %40 = vector.broadcast %39 : vector<1x96xf32> to vector<34x96xf32>
    %41 = arith.addf %37, %40 : vector<34x96xf32>
    %42 = vector.extract_strided_slice %41 {offsets = [0, 0], sizes = [34, 16], strides = [1, 1]} : vector<34x96xf32> to vector<34x16xf32>
    %43 = vector.extract_strided_slice %41 {offsets = [0, 32], sizes = [34, 16], strides = [1, 1]} : vector<34x96xf32> to vector<34x16xf32>
    %44 = vector.extract_strided_slice %41 {offsets = [0, 64], sizes = [34, 16], strides = [1, 1]} : vector<34x96xf32> to vector<34x16xf32>
    %cst_27 = arith.constant dense<0.000000e+00> : vector<34x34xf32>
    %45 = tpu.matmul %42, %43, %cst_27 {dimension_numbers = #tpu.dot_dimension_numbers<[1], [1], [0], [0], [0, 0, 1, 0], [], []>} : vector<34x16xf32>, vector<34x16xf32>, vector<34x34xf32> -> vector<34x34xf32>
    %cst_28 = arith.constant 2.500000e-01 : f32
    %46 = vector.broadcast %cst_28 : f32 to vector<34x34xf32>
    %47 = arith.mulf %45, %46 : vector<34x34xf32>
    %48 = arith.addf %47, %8 : vector<34x34xf32>
    %cst_29 = arith.constant dense<0xFF800000> : vector<34xf32>
    %49 = vector.multi_reduction <maximumf>, %48, %cst_29 [1] : vector<34x34xf32> to vector<34xf32>
    %cst_30 = arith.constant 0xFF800000 : f32
    %50 = vector.broadcast %cst_30 : f32 to vector<34xf32>
    %51 = arith.maximumf %50, %49 : vector<34xf32>
    %52 = vector.shape_cast %51 : vector<34xf32> to vector<34x1xf32>
    %53 = vector.broadcast %52 : vector<34x1xf32> to vector<34x34xf32>
    %54 = arith.subf %48, %53 : vector<34x34xf32>
    %55 = math.exp %54 : vector<34x34xf32>
    %cst_31 = arith.constant dense<0.000000e+00> : vector<34xf32>
    %56 = vector.multi_reduction <add>, %55, %cst_31 [1] : vector<34x34xf32> to vector<34xf32>
    %57 = vector.shape_cast %56 : vector<34xf32> to vector<34x1xf32>
    %58 = vector.broadcast %57 : vector<34x1xf32> to vector<34x34xf32>
    %59 = arith.divf %55, %58 : vector<34x34xf32>
    %cst_32 = arith.constant dense<0.000000e+00> : vector<34x16xf32>
    %60 = tpu.matmul %59, %44, %cst_32 {dimension_numbers = #tpu.dot_dimension_numbers<[1], [0], [0], [1], [0, 0, 1, 1], [], []>} : vector<34x34xf32>, vector<34x16xf32>, vector<34x16xf32> -> vector<34x16xf32>
    %61 = vector.extract_strided_slice %12 {offsets = [0, 0], sizes = [16, 32], strides = [1, 1]} : vector<32x32xf32> to vector<16x32xf32>
    %cst_33 = arith.constant dense<0.000000e+00> : vector<34x32xf32>
    %62 = tpu.matmul %60, %61, %cst_33 {dimension_numbers = #tpu.dot_dimension_numbers<[1], [0], [0], [1], [0, 0, 1, 1], [], []>} : vector<34x16xf32>, vector<16x32xf32>, vector<34x32xf32> -> vector<34x32xf32>
    %63 = vector.extract_strided_slice %41 {offsets = [0, 16], sizes = [34, 16], strides = [1, 1]} : vector<34x96xf32> to vector<34x16xf32>
    %64 = vector.extract_strided_slice %41 {offsets = [0, 48], sizes = [34, 16], strides = [1, 1]} : vector<34x96xf32> to vector<34x16xf32>
    %65 = vector.extract_strided_slice %41 {offsets = [0, 80], sizes = [34, 16], strides = [1, 1]} : vector<34x96xf32> to vector<34x16xf32>
    %cst_34 = arith.constant dense<0.000000e+00> : vector<34x34xf32>
    %66 = tpu.matmul %63, %64, %cst_34 {dimension_numbers = #tpu.dot_dimension_numbers<[1], [1], [0], [0], [0, 0, 1, 0], [], []>} : vector<34x16xf32>, vector<34x16xf32>, vector<34x34xf32> -> vector<34x34xf32>
    %cst_35 = arith.constant 2.500000e-01 : f32
    %67 = vector.broadcast %cst_35 : f32 to vector<34x34xf32>
    %68 = arith.mulf %66, %67 : vector<34x34xf32>
    %69 = arith.addf %68, %8 : vector<34x34xf32>
    %cst_36 = arith.constant dense<0xFF800000> : vector<34xf32>
    %70 = vector.multi_reduction <maximumf>, %69, %cst_36 [1] : vector<34x34xf32> to vector<34xf32>
    %cst_37 = arith.constant 0xFF800000 : f32
    %71 = vector.broadcast %cst_37 : f32 to vector<34xf32>
    %72 = arith.maximumf %71, %70 : vector<34xf32>
    %73 = vector.shape_cast %72 : vector<34xf32> to vector<34x1xf32>
    %74 = vector.broadcast %73 : vector<34x1xf32> to vector<34x34xf32>
    %75 = arith.subf %69, %74 : vector<34x34xf32>
    %76 = math.exp %75 : vector<34x34xf32>
    %cst_38 = arith.constant dense<0.000000e+00> : vector<34xf32>
    %77 = vector.multi_reduction <add>, %76, %cst_38 [1] : vector<34x34xf32> to vector<34xf32>
    %78 = vector.shape_cast %77 : vector<34xf32> to vector<34x1xf32>
    %79 = vector.broadcast %78 : vector<34x1xf32> to vector<34x34xf32>
    %80 = arith.divf %76, %79 : vector<34x34xf32>
    %cst_39 = arith.constant dense<0.000000e+00> : vector<34x16xf32>
    %81 = tpu.matmul %80, %65, %cst_39 {dimension_numbers = #tpu.dot_dimension_numbers<[1], [0], [0], [1], [0, 0, 1, 1], [], []>} : vector<34x34xf32>, vector<34x16xf32>, vector<34x16xf32> -> vector<34x16xf32>
    %82 = vector.extract_strided_slice %12 {offsets = [16, 0], sizes = [16, 32], strides = [1, 1]} : vector<32x32xf32> to vector<16x32xf32>
    %cst_40 = arith.constant dense<0.000000e+00> : vector<34x32xf32>
    %83 = tpu.matmul %81, %82, %cst_40 {dimension_numbers = #tpu.dot_dimension_numbers<[1], [0], [0], [1], [0, 0, 1, 1], [], []>} : vector<34x16xf32>, vector<16x32xf32>, vector<34x32xf32> -> vector<34x32xf32>
    %84 = arith.addf %62, %83 : vector<34x32xf32>
    %85 = arith.addf %7, %84 : vector<34x32xf32>
    %86 = vector.extract_strided_slice %10 {offsets = [4, 0], sizes = [1, 32], strides = [1, 1]} : vector<8x32xf32> to vector<1x32xf32>
    %87 = vector.broadcast %86 : vector<1x32xf32> to vector<34x32xf32>
    %88 = arith.addf %85, %87 : vector<34x32xf32>
    %89 = vector.extract_strided_slice %10 {offsets = [2, 0], sizes = [1, 32], strides = [1, 1]} : vector<8x32xf32> to vector<1x32xf32>
    %90 = vector.extract_strided_slice %10 {offsets = [3, 0], sizes = [1, 32], strides = [1, 1]} : vector<8x32xf32> to vector<1x32xf32>
    %cst_41 = arith.constant dense<0.000000e+00> : vector<34xf32>
    %91 = vector.multi_reduction <add>, %88, %cst_41 [1] : vector<34x32xf32> to vector<34xf32>
    %92 = vector.shape_cast %91 : vector<34xf32> to vector<34x1xf32>
    %cst_42 = arith.constant 3.200000e+01 : f32
    %93 = vector.broadcast %cst_42 : f32 to vector<34x1xf32>
    %94 = arith.divf %92, %93 : vector<34x1xf32>
    %95 = vector.broadcast %94 : vector<34x1xf32> to vector<34x32xf32>
    %96 = arith.subf %88, %95 : vector<34x32xf32>
    %97 = arith.mulf %96, %96 : vector<34x32xf32>
    %cst_43 = arith.constant dense<0.000000e+00> : vector<34xf32>
    %98 = vector.multi_reduction <add>, %97, %cst_43 [1] : vector<34x32xf32> to vector<34xf32>
    %99 = vector.shape_cast %98 : vector<34xf32> to vector<34x1xf32>
    %cst_44 = arith.constant 3.200000e+01 : f32
    %100 = vector.broadcast %cst_44 : f32 to vector<34x1xf32>
    %101 = arith.divf %99, %100 : vector<34x1xf32>
    %cst_45 = arith.constant 9.99999996E-13 : f32
    %102 = vector.broadcast %cst_45 : f32 to vector<34x1xf32>
    %103 = arith.addf %101, %102 : vector<34x1xf32>
    %104 = math.rsqrt %103 : vector<34x1xf32>
    %105 = vector.broadcast %104 : vector<34x1xf32> to vector<34x32xf32>
    %106 = arith.mulf %96, %105 : vector<34x32xf32>
    %107 = vector.broadcast %89 : vector<1x32xf32> to vector<34x32xf32>
    %108 = arith.mulf %106, %107 : vector<34x32xf32>
    %109 = vector.broadcast %90 : vector<1x32xf32> to vector<34x32xf32>
    %110 = arith.addf %108, %109 : vector<34x32xf32>
    %c0_46 = arith.constant 0 : index
    %c0_47 = arith.constant 0 : index
    %c0_48 = arith.constant 0 : index
    %111 = vector.load %arg9[%c0_46, %c0_47, %c0_48] : memref<2x32x128xf32, #tpu.memory_space<vmem>>, vector<1x32x128xf32>
    %112 = vector.shape_cast %111 : vector<1x32x128xf32> to vector<32x128xf32>
    %cst_49 = arith.constant dense<0.000000e+00> : vector<34x128xf32>
    %113 = tpu.matmul %110, %112, %cst_49 {dimension_numbers = #tpu.dot_dimension_numbers<[1], [0], [0], [1], [0, 0, 1, 1], [], []>} : vector<34x32xf32>, vector<32x128xf32>, vector<34x128xf32> -> vector<34x128xf32>
    %c0_50 = arith.constant 0 : index
    %c0_51 = arith.constant 0 : index
    %c0_52 = arith.constant 0 : index
    %114 = vector.load %arg10[%c0_50, %c0_51, %c0_52] : memref<2x1x128xf32, #tpu.memory_space<vmem>>, vector<1x1x128xf32>
    %115 = vector.shape_cast %114 : vector<1x1x128xf32> to vector<1x128xf32>
    %116 = vector.broadcast %115 : vector<1x128xf32> to vector<34x128xf32>
    %117 = arith.addf %113, %116 : vector<34x128xf32>
    %118 = arith.mulf %117, %117 : vector<34x128xf32>
    %119 = arith.mulf %117, %118 : vector<34x128xf32>
    %cst_53 = arith.constant 4.471500e-02 : f32
    %120 = vector.broadcast %cst_53 : f32 to vector<34x128xf32>
    %121 = arith.mulf %120, %119 : vector<34x128xf32>
    %122 = arith.addf %117, %121 : vector<34x128xf32>
    %cst_54 = arith.constant 0.797884583 : f32
    %123 = vector.broadcast %cst_54 : f32 to vector<34x128xf32>
    %124 = arith.mulf %123, %122 : vector<34x128xf32>
    %125 = math.tanh %124 : vector<34x128xf32>
    %cst_55 = arith.constant 1.000000e+00 : f32
    %126 = vector.broadcast %cst_55 : f32 to vector<34x128xf32>
    %127 = arith.addf %126, %125 : vector<34x128xf32>
    %cst_56 = arith.constant 5.000000e-01 : f32
    %128 = vector.broadcast %cst_56 : f32 to vector<34x128xf32>
    %129 = arith.mulf %128, %127 : vector<34x128xf32>
    %130 = arith.mulf %117, %129 : vector<34x128xf32>
    %c0_57 = arith.constant 0 : index
    %c0_58 = arith.constant 0 : index
    %c0_59 = arith.constant 0 : index
    %131 = vector.load %arg11[%c0_57, %c0_58, %c0_59] : memref<2x128x32xf32, #tpu.memory_space<vmem>>, vector<1x128x32xf32>
    %132 = vector.shape_cast %131 : vector<1x128x32xf32> to vector<128x32xf32>
    %cst_60 = arith.constant dense<0.000000e+00> : vector<34x32xf32>
    %133 = tpu.matmul %130, %132, %cst_60 {dimension_numbers = #tpu.dot_dimension_numbers<[1], [0], [0], [1], [0, 0, 1, 1], [], []>} : vector<34x128xf32>, vector<128x32xf32>, vector<34x32xf32> -> vector<34x32xf32>
    %134 = vector.extract_strided_slice %10 {offsets = [5, 0], sizes = [1, 32], strides = [1, 1]} : vector<8x32xf32> to vector<1x32xf32>
    %135 = vector.broadcast %134 : vector<1x32xf32> to vector<34x32xf32>
    %136 = arith.addf %133, %135 : vector<34x32xf32>
    %137 = arith.addf %88, %136 : vector<34x32xf32>
    %c1 = arith.constant 1 : index
    %c0_61 = arith.constant 0 : index
    %c0_62 = arith.constant 0 : index
    %138 = vector.load %arg8[%c1, %c0_61, %c0_62] : memref<2x8x32xf32, #tpu.memory_space<vmem>>, vector<1x8x32xf32>
    %139 = vector.shape_cast %138 : vector<1x8x32xf32> to vector<8x32xf32>
    %c1_63 = arith.constant 1 : index
    %c0_64 = arith.constant 0 : index
    %c0_65 = arith.constant 0 : index
    %140 = vector.load %arg7[%c1_63, %c0_64, %c0_65] : memref<2x32x32xf32, #tpu.memory_space<vmem>>, vector<1x32x32xf32>
    %141 = vector.shape_cast %140 : vector<1x32x32xf32> to vector<32x32xf32>
    %142 = vector.extract_strided_slice %139 {offsets = [0, 0], sizes = [1, 32], strides = [1, 1]} : vector<8x32xf32> to vector<1x32xf32>
    %143 = vector.extract_strided_slice %139 {offsets = [1, 0], sizes = [1, 32], strides = [1, 1]} : vector<8x32xf32> to vector<1x32xf32>
    %cst_66 = arith.constant dense<0.000000e+00> : vector<34xf32>
    %144 = vector.multi_reduction <add>, %137, %cst_66 [1] : vector<34x32xf32> to vector<34xf32>
    %145 = vector.shape_cast %144 : vector<34xf32> to vector<34x1xf32>
    %cst_67 = arith.constant 3.200000e+01 : f32
    %146 = vector.broadcast %cst_67 : f32 to vector<34x1xf32>
    %147 = arith.divf %145, %146 : vector<34x1xf32>
    %148 = vector.broadcast %147 : vector<34x1xf32> to vector<34x32xf32>
    %149 = arith.subf %137, %148 : vector<34x32xf32>
    %150 = arith.mulf %149, %149 : vector<34x32xf32>
    %cst_68 = arith.constant dense<0.000000e+00> : vector<34xf32>
    %151 = vector.multi_reduction <add>, %150, %cst_68 [1] : vector<34x32xf32> to vector<34xf32>
    %152 = vector.shape_cast %151 : vector<34xf32> to vector<34x1xf32>
    %cst_69 = arith.constant 3.200000e+01 : f32
    %153 = vector.broadcast %cst_69 : f32 to vector<34x1xf32>
    %154 = arith.divf %152, %153 : vector<34x1xf32>
    %cst_70 = arith.constant 9.99999996E-13 : f32
    %155 = vector.broadcast %cst_70 : f32 to vector<34x1xf32>
    %156 = arith.addf %154, %155 : vector<34x1xf32>
    %157 = math.rsqrt %156 : vector<34x1xf32>
    %158 = vector.broadcast %157 : vector<34x1xf32> to vector<34x32xf32>
    %159 = arith.mulf %149, %158 : vector<34x32xf32>
    %160 = vector.broadcast %142 : vector<1x32xf32> to vector<34x32xf32>
    %161 = arith.mulf %159, %160 : vector<34x32xf32>
    %162 = vector.broadcast %143 : vector<1x32xf32> to vector<34x32xf32>
    %163 = arith.addf %161, %162 : vector<34x32xf32>
    %c1_71 = arith.constant 1 : index
    %c0_72 = arith.constant 0 : index
    %c0_73 = arith.constant 0 : index
    %164 = vector.load %arg5[%c1_71, %c0_72, %c0_73] : memref<2x32x96xf32, #tpu.memory_space<vmem>>, vector<1x32x96xf32>
    %165 = vector.shape_cast %164 : vector<1x32x96xf32> to vector<32x96xf32>
    %cst_74 = arith.constant dense<0.000000e+00> : vector<34x96xf32>
    %166 = tpu.matmul %163, %165, %cst_74 {dimension_numbers = #tpu.dot_dimension_numbers<[1], [0], [0], [1], [0, 0, 1, 1], [], []>} : vector<34x32xf32>, vector<32x96xf32>, vector<34x96xf32> -> vector<34x96xf32>
    %c1_75 = arith.constant 1 : index
    %c0_76 = arith.constant 0 : index
    %c0_77 = arith.constant 0 : index
    %167 = vector.load %arg6[%c1_75, %c0_76, %c0_77] : memref<2x1x96xf32, #tpu.memory_space<vmem>>, vector<1x1x96xf32>
    %168 = vector.shape_cast %167 : vector<1x1x96xf32> to vector<1x96xf32>
    %169 = vector.broadcast %168 : vector<1x96xf32> to vector<34x96xf32>
    %170 = arith.addf %166, %169 : vector<34x96xf32>
    %171 = vector.extract_strided_slice %170 {offsets = [0, 0], sizes = [34, 16], strides = [1, 1]} : vector<34x96xf32> to vector<34x16xf32>
    %172 = vector.extract_strided_slice %170 {offsets = [0, 32], sizes = [34, 16], strides = [1, 1]} : vector<34x96xf32> to vector<34x16xf32>
    %173 = vector.extract_strided_slice %170 {offsets = [0, 64], sizes = [34, 16], strides = [1, 1]} : vector<34x96xf32> to vector<34x16xf32>
    %cst_78 = arith.constant dense<0.000000e+00> : vector<34x34xf32>
    %174 = tpu.matmul %171, %172, %cst_78 {dimension_numbers = #tpu.dot_dimension_numbers<[1], [1], [0], [0], [0, 0, 1, 0], [], []>} : vector<34x16xf32>, vector<34x16xf32>, vector<34x34xf32> -> vector<34x34xf32>
    %cst_79 = arith.constant 2.500000e-01 : f32
    %175 = vector.broadcast %cst_79 : f32 to vector<34x34xf32>
    %176 = arith.mulf %174, %175 : vector<34x34xf32>
    %177 = arith.addf %176, %8 : vector<34x34xf32>
    %cst_80 = arith.constant dense<0xFF800000> : vector<34xf32>
    %178 = vector.multi_reduction <maximumf>, %177, %cst_80 [1] : vector<34x34xf32> to vector<34xf32>
    %cst_81 = arith.constant 0xFF800000 : f32
    %179 = vector.broadcast %cst_81 : f32 to vector<34xf32>
    %180 = arith.maximumf %179, %178 : vector<34xf32>
    %181 = vector.shape_cast %180 : vector<34xf32> to vector<34x1xf32>
    %182 = vector.broadcast %181 : vector<34x1xf32> to vector<34x34xf32>
    %183 = arith.subf %177, %182 : vector<34x34xf32>
    %184 = math.exp %183 : vector<34x34xf32>
    %cst_82 = arith.constant dense<0.000000e+00> : vector<34xf32>
    %185 = vector.multi_reduction <add>, %184, %cst_82 [1] : vector<34x34xf32> to vector<34xf32>
    %186 = vector.shape_cast %185 : vector<34xf32> to vector<34x1xf32>
    %187 = vector.broadcast %186 : vector<34x1xf32> to vector<34x34xf32>
    %188 = arith.divf %184, %187 : vector<34x34xf32>
    %cst_83 = arith.constant dense<0.000000e+00> : vector<34x16xf32>
    %189 = tpu.matmul %188, %173, %cst_83 {dimension_numbers = #tpu.dot_dimension_numbers<[1], [0], [0], [1], [0, 0, 1, 1], [], []>} : vector<34x34xf32>, vector<34x16xf32>, vector<34x16xf32> -> vector<34x16xf32>
    %190 = vector.extract_strided_slice %141 {offsets = [0, 0], sizes = [16, 32], strides = [1, 1]} : vector<32x32xf32> to vector<16x32xf32>
    %cst_84 = arith.constant dense<0.000000e+00> : vector<34x32xf32>
    %191 = tpu.matmul %189, %190, %cst_84 {dimension_numbers = #tpu.dot_dimension_numbers<[1], [0], [0], [1], [0, 0, 1, 1], [], []>} : vector<34x16xf32>, vector<16x32xf32>, vector<34x32xf32> -> vector<34x32xf32>
    %192 = vector.extract_strided_slice %170 {offsets = [0, 16], sizes = [34, 16], strides = [1, 1]} : vector<34x96xf32> to vector<34x16xf32>
    %193 = vector.extract_strided_slice %170 {offsets = [0, 48], sizes = [34, 16], strides = [1, 1]} : vector<34x96xf32> to vector<34x16xf32>
    %194 = vector.extract_strided_slice %170 {offsets = [0, 80], sizes = [34, 16], strides = [1, 1]} : vector<34x96xf32> to vector<34x16xf32>
    %cst_85 = arith.constant dense<0.000000e+00> : vector<34x34xf32>
    %195 = tpu.matmul %192, %193, %cst_85 {dimension_numbers = #tpu.dot_dimension_numbers<[1], [1], [0], [0], [0, 0, 1, 0], [], []>} : vector<34x16xf32>, vector<34x16xf32>, vector<34x34xf32> -> vector<34x34xf32>
    %cst_86 = arith.constant 2.500000e-01 : f32
    %196 = vector.broadcast %cst_86 : f32 to vector<34x34xf32>
    %197 = arith.mulf %195, %196 : vector<34x34xf32>
    %198 = arith.addf %197, %8 : vector<34x34xf32>
    %cst_87 = arith.constant dense<0xFF800000> : vector<34xf32>
    %199 = vector.multi_reduction <maximumf>, %198, %cst_87 [1] : vector<34x34xf32> to vector<34xf32>
    %cst_88 = arith.constant 0xFF800000 : f32
    %200 = vector.broadcast %cst_88 : f32 to vector<34xf32>
    %201 = arith.maximumf %200, %199 : vector<34xf32>
    %202 = vector.shape_cast %201 : vector<34xf32> to vector<34x1xf32>
    %203 = vector.broadcast %202 : vector<34x1xf32> to vector<34x34xf32>
    %204 = arith.subf %198, %203 : vector<34x34xf32>
    %205 = math.exp %204 : vector<34x34xf32>
    %cst_89 = arith.constant dense<0.000000e+00> : vector<34xf32>
    %206 = vector.multi_reduction <add>, %205, %cst_89 [1] : vector<34x34xf32> to vector<34xf32>
    %207 = vector.shape_cast %206 : vector<34xf32> to vector<34x1xf32>
    %208 = vector.broadcast %207 : vector<34x1xf32> to vector<34x34xf32>
    %209 = arith.divf %205, %208 : vector<34x34xf32>
    %cst_90 = arith.constant dense<0.000000e+00> : vector<34x16xf32>
    %210 = tpu.matmul %209, %194, %cst_90 {dimension_numbers = #tpu.dot_dimension_numbers<[1], [0], [0], [1], [0, 0, 1, 1], [], []>} : vector<34x34xf32>, vector<34x16xf32>, vector<34x16xf32> -> vector<34x16xf32>
    %211 = vector.extract_strided_slice %141 {offsets = [16, 0], sizes = [16, 32], strides = [1, 1]} : vector<32x32xf32> to vector<16x32xf32>
    %cst_91 = arith.constant dense<0.000000e+00> : vector<34x32xf32>
    %212 = tpu.matmul %210, %211, %cst_91 {dimension_numbers = #tpu.dot_dimension_numbers<[1], [0], [0], [1], [0, 0, 1, 1], [], []>} : vector<34x16xf32>, vector<16x32xf32>, vector<34x32xf32> -> vector<34x32xf32>
    %213 = arith.addf %191, %212 : vector<34x32xf32>
    %214 = arith.addf %137, %213 : vector<34x32xf32>
    %215 = vector.extract_strided_slice %139 {offsets = [4, 0], sizes = [1, 32], strides = [1, 1]} : vector<8x32xf32> to vector<1x32xf32>
    %216 = vector.broadcast %215 : vector<1x32xf32> to vector<34x32xf32>
    %217 = arith.addf %214, %216 : vector<34x32xf32>
    %218 = vector.extract_strided_slice %139 {offsets = [2, 0], sizes = [1, 32], strides = [1, 1]} : vector<8x32xf32> to vector<1x32xf32>
    %219 = vector.extract_strided_slice %139 {offsets = [3, 0], sizes = [1, 32], strides = [1, 1]} : vector<8x32xf32> to vector<1x32xf32>
    %cst_92 = arith.constant dense<0.000000e+00> : vector<34xf32>
    %220 = vector.multi_reduction <add>, %217, %cst_92 [1] : vector<34x32xf32> to vector<34xf32>
    %221 = vector.shape_cast %220 : vector<34xf32> to vector<34x1xf32>
    %cst_93 = arith.constant 3.200000e+01 : f32
    %222 = vector.broadcast %cst_93 : f32 to vector<34x1xf32>
    %223 = arith.divf %221, %222 : vector<34x1xf32>
    %224 = vector.broadcast %223 : vector<34x1xf32> to vector<34x32xf32>
    %225 = arith.subf %217, %224 : vector<34x32xf32>
    %226 = arith.mulf %225, %225 : vector<34x32xf32>
    %cst_94 = arith.constant dense<0.000000e+00> : vector<34xf32>
    %227 = vector.multi_reduction <add>, %226, %cst_94 [1] : vector<34x32xf32> to vector<34xf32>
    %228 = vector.shape_cast %227 : vector<34xf32> to vector<34x1xf32>
    %cst_95 = arith.constant 3.200000e+01 : f32
    %229 = vector.broadcast %cst_95 : f32 to vector<34x1xf32>
    %230 = arith.divf %228, %229 : vector<34x1xf32>
    %cst_96 = arith.constant 9.99999996E-13 : f32
    %231 = vector.broadcast %cst_96 : f32 to vector<34x1xf32>
    %232 = arith.addf %230, %231 : vector<34x1xf32>
    %233 = math.rsqrt %232 : vector<34x1xf32>
    %234 = vector.broadcast %233 : vector<34x1xf32> to vector<34x32xf32>
    %235 = arith.mulf %225, %234 : vector<34x32xf32>
    %236 = vector.broadcast %218 : vector<1x32xf32> to vector<34x32xf32>
    %237 = arith.mulf %235, %236 : vector<34x32xf32>
    %238 = vector.broadcast %219 : vector<1x32xf32> to vector<34x32xf32>
    %239 = arith.addf %237, %238 : vector<34x32xf32>
    %c1_97 = arith.constant 1 : index
    %c0_98 = arith.constant 0 : index
    %c0_99 = arith.constant 0 : index
    %240 = vector.load %arg9[%c1_97, %c0_98, %c0_99] : memref<2x32x128xf32, #tpu.memory_space<vmem>>, vector<1x32x128xf32>
    %241 = vector.shape_cast %240 : vector<1x32x128xf32> to vector<32x128xf32>
    %cst_100 = arith.constant dense<0.000000e+00> : vector<34x128xf32>
    %242 = tpu.matmul %239, %241, %cst_100 {dimension_numbers = #tpu.dot_dimension_numbers<[1], [0], [0], [1], [0, 0, 1, 1], [], []>} : vector<34x32xf32>, vector<32x128xf32>, vector<34x128xf32> -> vector<34x128xf32>
    %c1_101 = arith.constant 1 : index
    %c0_102 = arith.constant 0 : index
    %c0_103 = arith.constant 0 : index
    %243 = vector.load %arg10[%c1_101, %c0_102, %c0_103] : memref<2x1x128xf32, #tpu.memory_space<vmem>>, vector<1x1x128xf32>
    %244 = vector.shape_cast %243 : vector<1x1x128xf32> to vector<1x128xf32>
    %245 = vector.broadcast %244 : vector<1x128xf32> to vector<34x128xf32>
    %246 = arith.addf %242, %245 : vector<34x128xf32>
    %247 = arith.mulf %246, %246 : vector<34x128xf32>
    %248 = arith.mulf %246, %247 : vector<34x128xf32>
    %cst_104 = arith.constant 4.471500e-02 : f32
    %249 = vector.broadcast %cst_104 : f32 to vector<34x128xf32>
    %250 = arith.mulf %249, %248 : vector<34x128xf32>
    %251 = arith.addf %246, %250 : vector<34x128xf32>
    %cst_105 = arith.constant 0.797884583 : f32
    %252 = vector.broadcast %cst_105 : f32 to vector<34x128xf32>
    %253 = arith.mulf %252, %251 : vector<34x128xf32>
    %254 = math.tanh %253 : vector<34x128xf32>
    %cst_106 = arith.constant 1.000000e+00 : f32
    %255 = vector.broadcast %cst_106 : f32 to vector<34x128xf32>
    %256 = arith.addf %255, %254 : vector<34x128xf32>
    %cst_107 = arith.constant 5.000000e-01 : f32
    %257 = vector.broadcast %cst_107 : f32 to vector<34x128xf32>
    %258 = arith.mulf %257, %256 : vector<34x128xf32>
    %259 = arith.mulf %246, %258 : vector<34x128xf32>
    %c1_108 = arith.constant 1 : index
    %c0_109 = arith.constant 0 : index
    %c0_110 = arith.constant 0 : index
    %260 = vector.load %arg11[%c1_108, %c0_109, %c0_110] : memref<2x128x32xf32, #tpu.memory_space<vmem>>, vector<1x128x32xf32>
    %261 = vector.shape_cast %260 : vector<1x128x32xf32> to vector<128x32xf32>
    %cst_111 = arith.constant dense<0.000000e+00> : vector<34x32xf32>
    %262 = tpu.matmul %259, %261, %cst_111 {dimension_numbers = #tpu.dot_dimension_numbers<[1], [0], [0], [1], [0, 0, 1, 1], [], []>} : vector<34x128xf32>, vector<128x32xf32>, vector<34x32xf32> -> vector<34x32xf32>
    %263 = vector.extract_strided_slice %139 {offsets = [5, 0], sizes = [1, 32], strides = [1, 1]} : vector<8x32xf32> to vector<1x32xf32>
    %264 = vector.broadcast %263 : vector<1x32xf32> to vector<34x32xf32>
    %265 = arith.addf %262, %264 : vector<34x32xf32>
    %266 = arith.addf %217, %265 : vector<34x32xf32>
    %c0_112 = arith.constant 0 : index
    %c0_113 = arith.constant 0 : index
    %267 = vector.load %arg12[%c0_112, %c0_113] : memref<2x32xf32, #tpu.memory_space<vmem>>, vector<2x32xf32>
    %268 = vector.extract_strided_slice %267 {offsets = [0, 0], sizes = [1, 32], strides = [1, 1]} : vector<2x32xf32> to vector<1x32xf32>
    %269 = vector.extract_strided_slice %267 {offsets = [1, 0], sizes = [1, 32], strides = [1, 1]} : vector<2x32xf32> to vector<1x32xf32>
    %cst_114 = arith.constant dense<0.000000e+00> : vector<34xf32>
    %270 = vector.multi_reduction <add>, %266, %cst_114 [1] : vector<34x32xf32> to vector<34xf32>
    %271 = vector.shape_cast %270 : vector<34xf32> to vector<34x1xf32>
    %cst_115 = arith.constant 3.200000e+01 : f32
    %272 = vector.broadcast %cst_115 : f32 to vector<34x1xf32>
    %273 = arith.divf %271, %272 : vector<34x1xf32>
    %274 = vector.broadcast %273 : vector<34x1xf32> to vector<34x32xf32>
    %275 = arith.subf %266, %274 : vector<34x32xf32>
    %276 = arith.mulf %275, %275 : vector<34x32xf32>
    %cst_116 = arith.constant dense<0.000000e+00> : vector<34xf32>
    %277 = vector.multi_reduction <add>, %276, %cst_116 [1] : vector<34x32xf32> to vector<34xf32>
    %278 = vector.shape_cast %277 : vector<34xf32> to vector<34x1xf32>
    %cst_117 = arith.constant 3.200000e+01 : f32
    %279 = vector.broadcast %cst_117 : f32 to vector<34x1xf32>
    %280 = arith.divf %278, %279 : vector<34x1xf32>
    %cst_118 = arith.constant 9.99999996E-13 : f32
    %281 = vector.broadcast %cst_118 : f32 to vector<34x1xf32>
    %282 = arith.addf %280, %281 : vector<34x1xf32>
    %283 = math.rsqrt %282 : vector<34x1xf32>
    %284 = vector.broadcast %283 : vector<34x1xf32> to vector<34x32xf32>
    %285 = arith.mulf %275, %284 : vector<34x32xf32>
    %286 = vector.broadcast %268 : vector<1x32xf32> to vector<34x32xf32>
    %287 = arith.mulf %285, %286 : vector<34x32xf32>
    %288 = vector.broadcast %269 : vector<1x32xf32> to vector<34x32xf32>
    %289 = arith.addf %287, %288 : vector<34x32xf32>
    %c0_119 = arith.constant 0 : index
    %c0_120 = arith.constant 0 : index
    %290 = vector.load %arg13[%c0_119, %c0_120] : memref<32x128xf32, #tpu.memory_space<vmem>>, vector<32x128xf32>
    %cst_121 = arith.constant dense<0.000000e+00> : vector<34x128xf32>
    %291 = tpu.matmul %289, %290, %cst_121 {dimension_numbers = #tpu.dot_dimension_numbers<[1], [0], [0], [1], [0, 0, 1, 1], [], []>} : vector<34x32xf32>, vector<32x128xf32>, vector<34x128xf32> -> vector<34x128xf32>
    %c0_122 = arith.constant 0 : index
    %c0_123 = arith.constant 0 : index
    %292 = vector.load %arg14[%c0_122, %c0_123] : memref<1x128xf32, #tpu.memory_space<vmem>>, vector<1x128xf32>
    %293 = vector.broadcast %292 : vector<1x128xf32> to vector<34x128xf32>
    %294 = arith.addf %291, %293 : vector<34x128xf32>
    %c0_124 = arith.constant 0 : index
    %c0_125 = arith.constant 0 : index
    %295 = vector.load %arg15[%c0_124, %c0_125] : memref<34x128xf32, #tpu.memory_space<vmem>>, vector<34x128xf32>
    tpu.vector_store %arg15[%c0_124, %c0_125], %294 {strides = array<i32>} : memref<34x128xf32, #tpu.memory_space<vmem>>, vector<34x128xf32>,
    return
  }
}

</mosaic_0001>

<llo_original>
// kernel: segmented_vit_forward.1
$region0: #{segmented_vit_forward.1}
  #allocation0 [shape = 'u32[]', space=smem, size = 0x4, offset = 0x4, fixed_abs, tag = 'smem constant byte address 0x4 - core index']
  #allocation1 [shape = 'u32[72,128]{1,0:T(1,128)}', space=vmem, size = 0x9000, scoped, tag = 'internal scratch']
  %s0 = inlined_call_operand.vmem [shape: f32[34,48], index: 0, kind: input, shape index: {}]
  %s1 = inlined_call_operand.vmem [shape: f32[48,32], index: 1, kind: input, shape index: {}]
  %s2 = inlined_call_operand.vmem [shape: f32[1,32], index: 2, kind: input, shape index: {}]
  %s3 = inlined_call_operand.vmem [shape: f32[34,32], index: 3, kind: input, shape index: {}]
  %s4 = inlined_call_operand.vmem [shape: f32[34,34], index: 4, kind: input, shape index: {}]
  %s5 = inlined_call_operand.vmem [shape: f32[2,32,96], index: 5, kind: input, shape index: {}]
  %s6 = inlined_call_operand.vmem [shape: f32[2,1,96], index: 6, kind: input, shape index: {}]
  %s7 = inlined_call_operand.vmem [shape: f32[2,32,32], index: 7, kind: input, shape index: {}]
  %s8 = inlined_call_operand.vmem [shape: f32[2,8,32], index: 8, kind: input, shape index: {}]
  %s9 = inlined_call_operand.vmem [shape: f32[2,32,128], index: 9, kind: input, shape index: {}]
  %s10 = inlined_call_operand.vmem [shape: f32[2,1,128], index: 10, kind: input, shape index: {}]
  %s11 = inlined_call_operand.vmem [shape: f32[2,128,32], index: 11, kind: input, shape index: {}]
  %s12 = inlined_call_operand.vmem [shape: f32[2,32], index: 12, kind: input, shape index: {}]
  %s13 = inlined_call_operand.vmem [shape: f32[32,128], index: 13, kind: input, shape index: {}]
  %s14 = inlined_call_operand.vmem [shape: f32[1,128], index: 14, kind: input, shape index: {}]
  %s15 = inlined_call_operand.vmem [shape: f32[34,128], index: 15, kind: output, shape index: {}]
  %s16 = sld [smem:[#allocation0]]
  $region70: #{segmented_vit_forward.1} parent=0
    _
  %s18 = ssub.s32 1, %s16
  %s19 = scalar_select 0, %s18, %s16
  // Predicated region
  $region2: #{segmented_vit_forward.1} parent=0 // pred_check
    _
  $region3: #{segmented_vit_forward.1} parent=0 // pred_check_branch
    %21 = sbr.rel (0) target = $region5
  $region4: #{segmented_vit_forward.1} parent=0 // pred_region
    _
  $region5: #{segmented_vit_forward.1} parent=0 // pred_fallthru
    _
  // Predicated region
  $region6: #{segmented_vit_forward.1} parent=0 // pred_check
    _
  $region7: #{segmented_vit_forward.1} parent=0 // pred_check_branch
    %23 = sbr.rel (0) target = $region9
  $region8: #{segmented_vit_forward.1} parent=0 // pred_region
    _
  $region9: #{segmented_vit_forward.1} parent=0 // pred_fallthru
    _
  // Predicated region
  $region10: #{segmented_vit_forward.1} parent=0 // pred_check
    _
  $region11: #{segmented_vit_forward.1} parent=0 // pred_check_branch
    %25 = sbr.rel (0) target = $region13
  $region12: #{segmented_vit_forward.1} parent=0 // pred_region
    _
  $region13: #{segmented_vit_forward.1} parent=0 // pred_fallthru
    _
  // Predicated region
  $region14: #{segmented_vit_forward.1} parent=0 // pred_check
    _
  $region15: #{segmented_vit_forward.1} parent=0 // pred_check_branch
    %27 = sbr.rel (0) target = $region17
  $region16: #{segmented_vit_forward.1} parent=0 // pred_region
    _
  $region17: #{segmented_vit_forward.1} parent=0 // pred_fallthru
    _
  // Predicated region
  $region18: #{segmented_vit_forward.1} parent=0 // pred_check
    _
  $region19: #{segmented_vit_forward.1} parent=0 // pred_check_branch
    %29 = sbr.rel (0) target = $region21
  $region20: #{segmented_vit_forward.1} parent=0 // pred_region
    _
  $region21: #{segmented_vit_forward.1} parent=0 // pred_fallthru
    _
  // Predicated region
  $region22: #{segmented_vit_forward.1} parent=0 // pred_check
    _
  $region23: #{segmented_vit_forward.1} parent=0 // pred_check_branch
    %31 = sbr.rel (0) target = $region25
  $region24: #{segmented_vit_forward.1} parent=0 // pred_region
    _
  $region25: #{segmented_vit_forward.1} parent=0 // pred_fallthru
    _
  // Predicated region
  $region26: #{segmented_vit_forward.1} parent=0 // pred_check
    _
  $region27: #{segmented_vit_forward.1} parent=0 // pred_check_branch
    %33 = sbr.rel (0) target = $region29
  $region28: #{segmented_vit_forward.1} parent=0 // pred_region
    _
  $region29: #{segmented_vit_forward.1} parent=0 // pred_fallthru
    _
  // Predicated region
  $region30: #{segmented_vit_forward.1} parent=0 // pred_check
    _
  $region31: #{segmented_vit_forward.1} parent=0 // pred_check_branch
    %35 = sbr.rel (0) target = $region33
  $region32: #{segmented_vit_forward.1} parent=0 // pred_region
    _
  $region33: #{segmented_vit_forward.1} parent=0 // pred_fallthru
    _
  // Predicated region
  $region34: #{segmented_vit_forward.1} parent=0 // pred_check
    _
  $region35: #{segmented_vit_forward.1} parent=0 // pred_check_branch
    %37 = sbr.rel (0) target = $region37
  $region36: #{segmented_vit_forward.1} parent=0 // pred_region
    _
  $region37: #{segmented_vit_forward.1} parent=0 // pred_fallthru
    _
  // Predicated region
  $region38: #{segmented_vit_forward.1} parent=0 // pred_check
    _
  $region39: #{segmented_vit_forward.1} parent=0 // pred_check_branch
    %39 = sbr.rel (0) target = $region41
  $region40: #{segmented_vit_forward.1} parent=0 // pred_region
    _
  $region41: #{segmented_vit_forward.1} parent=0 // pred_fallthru
    _
  // Predicated region
  $region42: #{segmented_vit_forward.1} parent=0 // pred_check
    _
  $region43: #{segmented_vit_forward.1} parent=0 // pred_check_branch
    %41 = sbr.rel (0) target = $region45
  $region44: #{segmented_vit_forward.1} parent=0 // pred_region
    _
  $region45: #{segmented_vit_forward.1} parent=0 // pred_fallthru
    _
  // Predicated region
  $region46: #{segmented_vit_forward.1} parent=0 // pred_check
    _
  $region47: #{segmented_vit_forward.1} parent=0 // pred_check_branch
    %43 = sbr.rel (0) target = $region49
  $region48: #{segmented_vit_forward.1} parent=0 // pred_region
    _
  $region49: #{segmented_vit_forward.1} parent=0 // pred_fallthru
    _
  // Predicated region
  $region50: #{segmented_vit_forward.1} parent=0 // pred_check
    _
  $region51: #{segmented_vit_forward.1} parent=0 // pred_check_branch
    %45 = sbr.rel (0) target = $region53
  $region52: #{segmented_vit_forward.1} parent=0 // pred_region
    _
  $region53: #{segmented_vit_forward.1} parent=0 // pred_fallthru
    _
  // Predicated region
  $region54: #{segmented_vit_forward.1} parent=0 // pred_check
    _
  $region55: #{segmented_vit_forward.1} parent=0 // pred_check_branch
    %47 = sbr.rel (0) target = $region57
  $region56: #{segmented_vit_forward.1} parent=0 // pred_region
    _
  $region57: #{segmented_vit_forward.1} parent=0 // pred_fallthru
    _
  // Predicated region
  $region58: #{segmented_vit_forward.1} parent=0 // pred_check
    _
  $region59: #{segmented_vit_forward.1} parent=0 // pred_check_branch
    %49 = sbr.rel (0) target = $region61
  $region60: #{segmented_vit_forward.1} parent=0 // pred_region
    _
  $region61: #{segmented_vit_forward.1} parent=0 // pred_fallthru
    _
  %v50 = vld [vmem:[%s0] sm:$0xff]
  %v51 = vld [vmem:[%s0 + $0x8] sm:$0xff]
  %v52 = vld [vmem:[%s0 + $0x10] sm:$0xff]
  %v53 = vld [vmem:[%s0 + $0x18] sm:$0xff]
  %v54 = vld [vmem:[%s0 + $0x20] sm:$0x3]
  %v55 = vld [vmem:[%s1] sm:$0xff]
  %v56 = vld [vmem:[%s1 + $0x8] sm:$0xff]
  %v57 = vld [vmem:[%s1 + $0x10] sm:$0xff]
  %v58 = vld [vmem:[%s1 + $0x18] sm:$0xff]
  %v59 = vld [vmem:[%s1 + $0x20] sm:$0xff]
  %v60 = vld [vmem:[%s1 + $0x28] sm:$0xff]
  %v61 = vld [vmem:[%s2] sm:$0x1]
  %v63 = vperm.slane %v61, 0
  %vm65 = vcmask 392192
  %v67 = vsel %vm65, %v50, 0
  %v70 = vsel %vm65, %v51, 0
  %v73 = vsel %vm65, %v52, 0
  %v76 = vsel %vm65, %v53, 0
  %v79 = vsel %vm65, %v54, 0
  %81 = vmatpush.msra.mxu0 0.0
  %82 = vmatpush.msra.mxu0 0.0
  %83 = vmatpush.msra.mxu0 0.0
  %84 = vmatpush.msra.mxu0 0.0
  %85 = vmatpush.msra.mxu0 0.0
  %86 = vmatpush.msra.mxu0 0.0
  %87 = vmatpush.msra.mxu0 0.0
  %88 = vmatpush.msra.mxu0 0.0
  %89 = vmatpush.msra.mxu0 0.0
  %90 = vmatpush.msra.mxu0 0.0
  %91 = vmatpush.msra.mxu0 %v60
  %92 = vmatpush.msra.mxu0 %v59
  %93 = vmatpush.msra.mxu0 %v58
  %94 = vmatpush.msra.mxu0 %v57
  %95 = vmatpush.msra.mxu0 %v56
  %96 = vmatpush.msra.mxu0 %v55
  %97 = vmatmul.f32.gmra.mxu0 %v67
  %v98 = vpop.f32.mrf.mxu0
  %v99 = vadd.f32 %v63, %v98
  %100 = vmatmul.f32.gmra.mxu0 %v70
  %v101 = vpop.f32.mrf.mxu0
  %v102 = vadd.f32 %v63, %v101
  %103 = vmatmul.f32.gmra.mxu0 %v73
  %v104 = vpop.f32.mrf.mxu0
  %v105 = vadd.f32 %v63, %v104
  %106 = vmatmul.f32.gmra.mxu0 %v76
  %v107 = vpop.f32.mrf.mxu0
  %v108 = vadd.f32 %v63, %v107
  %109 = vmatmul.f32.gmra.mxu0 %v79
  %v110 = vpop.f32.mrf.mxu0
  %v111 = vadd.f32 %v63, %v110
  %112 = vdwg.mxu0
  %v113 = vld [vmem:[%s3] sm:$0xff]
  %v114 = vld [vmem:[%s3 + $0x8] sm:$0xff]
  %v115 = vld [vmem:[%s3 + $0x10] sm:$0xff]
  %v116 = vld [vmem:[%s3 + $0x18] sm:$0xff]
  %v117 = vld [vmem:[%s3 + $0x20] sm:$0x3]
  %v118 = vadd.f32 %v99, %v113
  %v119 = vadd.f32 %v102, %v114
  %v120 = vadd.f32 %v105, %v115
  %v121 = vadd.f32 %v108, %v116
  %v122 = vadd.f32 %v111, %v117
  %v123 = vld [vmem:[%s4] sm:$0xff]
  %v124 = vld [vmem:[%s4 + $0x8] sm:$0xff]
  %v125 = vld [vmem:[%s4 + $0x10] sm:$0xff]
  %v126 = vld [vmem:[%s4 + $0x18] sm:$0xff]
  %v127 = vld [vmem:[%s4 + $0x20] sm:$0x3]
  %v128 = vld [vmem:[%s8] sm:$0xff]
  %v129 = vld [vmem:[%s7] sm:$0xff]
  %v130 = vld [vmem:[%s7 + $0x8] sm:$0xff]
  %v131 = vld [vmem:[%s7 + $0x10] sm:$0xff]
  %v132 = vld [vmem:[%s7 + $0x18] sm:$0xff]
  %vm133 = vcmask 261120
  %v134 = vsel %vm133, %v118, 0.0
  %135 = vadd.xlane.f32.xlu0 %v134
  %v136 = vpop.xlane.xlu0 %135
  %v137 = vsel %vm133, %v119, 0.0
  %138 = vadd.xlane.f32.xlu0 %v137
  %v139 = vpop.xlane.xlu0 %138
  %v140 = vsel %vm133, %v120, 0.0
  %141 = vadd.xlane.f32.xlu0 %v140
  %v142 = vpop.xlane.xlu0 %141
  %v143 = vsel %vm133, %v121, 0.0
  %144 = vadd.xlane.f32.xlu0 %v143
  %v145 = vpop.xlane.xlu0 %144
  %vm146 = vcmask 254976
  %v147 = vsel %vm146, %v122, 0.0
  %148 = vadd.xlane.f32.xlu0 %v147
  %v149 = vpop.xlane.xlu0 %148
  %v150 = vrcp.pop 32.0
  %v151 = vmul.f32 32.0, %v150
  %v152 = vsub.f32 1.0, %v151
  %v153 = vmul.f32 %v150, %v152
  %v154 = vadd.f32 %v150, %v153
  %vm155 = vweird.f32 %v150
  %v156 = vsel %vm155, %v150, %v154
  %v157 = vmul.f32 %v136, %v156
  %v158 = vmul.f32 %v139, %v156
  %v159 = vmul.f32 %v142, %v156
  %v160 = vmul.f32 %v145, %v156
  %v161 = vmul.f32 %v149, %v156
  %v162 = vsub.f32 %v118, %v157
  %v163 = vsub.f32 %v119, %v158
  %v164 = vsub.f32 %v120, %v159
  %v165 = vsub.f32 %v121, %v160
  %v166 = vsub.f32 %v122, %v161
  %v167 = vmul.f32 %v162, %v162
  %v168 = vmul.f32 %v163, %v163
  %v169 = vmul.f32 %v164, %v164
  %v170 = vmul.f32 %v165, %v165
  %v171 = vmul.f32 %v166, %v166
  %v172 = vsel %vm133, %v167, 0.0
  %173 = vadd.xlane.f32.xlu0 %v172
  %v174 = vpop.xlane.xlu0 %173
  %v175 = vsel %vm133, %v168, 0.0
  %176 = vadd.xlane.f32.xlu0 %v175
  %v177 = vpop.xlane.xlu0 %176
  %v178 = vsel %vm133, %v169, 0.0
  %179 = vadd.xlane.f32.xlu0 %v178
  %v180 = vpop.xlane.xlu0 %179
  %v181 = vsel %vm133, %v170, 0.0
  %182 = vadd.xlane.f32.xlu0 %v181
  %v183 = vpop.xlane.xlu0 %182
  %v184 = vsel %vm146, %v171, 0.0
  %185 = vadd.xlane.f32.xlu0 %v184
  %v186 = vpop.xlane.xlu0 %185
  %v187 = vmul.f32 %v174, %v156
  %v188 = vmul.f32 %v177, %v156
  %v189 = vmul.f32 %v180, %v156
  %v190 = vmul.f32 %v183, %v156
  %v191 = vmul.f32 %v186, %v156
  %v192 = vadd.f32 %v187, 1e-12
  %v193 = vadd.f32 %v188, 1e-12
  %v194 = vadd.f32 %v189, 1e-12
  %v195 = vadd.f32 %v190, 1e-12
  %v196 = vadd.f32 %v191, 1e-12
  %v197 = vrsqrt.pop %v192
  %v198 = vmul.f32 %v197, %v192
  %v199 = vmul.f32 %v198, %v197
  %v200 = vmul.f32 0.5, %v199
  %v201 = vsub.f32 1.5, %v200
  %v202 = vmul.f32 %v197, %v201
  %vm203 = vweird.f32 %v192
  %vm204 = vweird.f32 %v197
  %vm205 = vmor %vm203, %vm204
  %v206 = vsel %vm205, %v197, %v202
  %v207 = vrsqrt.pop %v193
  %v208 = vmul.f32 %v207, %v193
  %v209 = vmul.f32 %v208, %v207
  %v210 = vmul.f32 0.5, %v209
  %v211 = vsub.f32 1.5, %v210
  %v212 = vmul.f32 %v207, %v211
  %vm213 = vweird.f32 %v193
  %vm214 = vweird.f32 %v207
  %vm215 = vmor %vm213, %vm214
  %v216 = vsel %vm215, %v207, %v212
  %v217 = vrsqrt.pop %v194
  %v218 = vmul.f32 %v217, %v194
  %v219 = vmul.f32 %v218, %v217
  %v220 = vmul.f32 0.5, %v219
  %v221 = vsub.f32 1.5, %v220
  %v222 = vmul.f32 %v217, %v221
  %vm223 = vweird.f32 %v194
  %vm224 = vweird.f32 %v217
  %vm225 = vmor %vm223, %vm224
  %v226 = vsel %vm225, %v217, %v222
  %v227 = vrsqrt.pop %v195
  %v228 = vmul.f32 %v227, %v195
  %v229 = vmul.f32 %v228, %v227
  %v230 = vmul.f32 0.5, %v229
  %v231 = vsub.f32 1.5, %v230
  %v232 = vmul.f32 %v227, %v231
  %vm233 = vweird.f32 %v195
  %vm234 = vweird.f32 %v227
  %vm235 = vmor %vm233, %vm234
  %v236 = vsel %vm235, %v227, %v232
  %v237 = vrsqrt.pop %v196
  %v238 = vmul.f32 %v237, %v196
  %v239 = vmul.f32 %v238, %v237
  %v240 = vmul.f32 0.5, %v239
  %v241 = vsub.f32 1.5, %v240
  %v242 = vmul.f32 %v237, %v241
  %vm243 = vweird.f32 %v196
  %vm244 = vweird.f32 %v237
  %vm245 = vmor %vm243, %vm244
  %v246 = vsel %vm245, %v237, %v242
  %v247 = vmul.f32 %v162, %v206
  %v248 = vmul.f32 %v163, %v216
  %v249 = vmul.f32 %v164, %v226
  %v250 = vmul.f32 %v165, %v236
  %v251 = vmul.f32 %v166, %v246
  %v252 = vperm.slane %v128, 0
  %v253 = vmul.f32 %v247, %v252
  %v254 = vmul.f32 %v248, %v252
  %v255 = vmul.f32 %v249, %v252
  %v256 = vmul.f32 %v250, %v252
  %v257 = vmul.f32 %v251, %v252
  %v258 = vperm.slane %v128, 1
  %v259 = vadd.f32 %v253, %v258
  %v260 = vadd.f32 %v254, %v258
  %v261 = vadd.f32 %v255, %v258
  %v262 = vadd.f32 %v256, %v258
  %v263 = vadd.f32 %v257, %v258
  %v264 = vld [vmem:[%s5] sm:$0xff]
  %v265 = vld [vmem:[%s5 + $0x8] sm:$0xff]
  %v266 = vld [vmem:[%s5 + $0x10] sm:$0xff]
  %v267 = vld [vmem:[%s5 + $0x18] sm:$0xff]
  %v268 = vld [vmem:[%s6] sm:$0x1]
  %v270 = vperm.slane %v268, 0
  %v273 = vsel %vm133, %v259, 0
  %v276 = vsel %vm133, %v260, 0
  %v279 = vsel %vm133, %v261, 0
  %v282 = vsel %vm133, %v262, 0
  %v285 = vsel %vm133, %v263, 0
  %287 = vmatpush.msra.mxu0 0.0
  %288 = vmatpush.msra.mxu0 0.0
  %289 = vmatpush.msra.mxu0 0.0
  %290 = vmatpush.msra.mxu0 0.0
  %291 = vmatpush.msra.mxu0 0.0
  %292 = vmatpush.msra.mxu0 0.0
  %293 = vmatpush.msra.mxu0 0.0
  %294 = vmatpush.msra.mxu0 0.0
  %295 = vmatpush.msra.mxu0 0.0
  %296 = vmatpush.msra.mxu0 0.0
  %297 = vmatpush.msra.mxu0 0.0
  %298 = vmatpush.msra.mxu0 0.0
  %299 = vmatpush.msra.mxu0 %v267
  %300 = vmatpush.msra.mxu0 %v266
  %301 = vmatpush.msra.mxu0 %v265
  %302 = vmatpush.msra.mxu0 %v264
  %303 = vmatmul.f32.gmra.mxu0 %v273
  %v304 = vpop.f32.mrf.mxu0
  %v305 = vadd.f32 %v270, %v304
  %306 = vmatmul.f32.gmra.mxu0 %v276
  %v307 = vpop.f32.mrf.mxu0
  %v308 = vadd.f32 %v270, %v307
  %309 = vmatmul.f32.gmra.mxu0 %v279
  %v310 = vpop.f32.mrf.mxu0
  %v311 = vadd.f32 %v270, %v310
  %312 = vmatmul.f32.gmra.mxu0 %v282
  %v313 = vpop.f32.mrf.mxu0
  %v314 = vadd.f32 %v270, %v313
  %315 = vmatmul.f32.gmra.mxu0 %v285
  %v316 = vpop.f32.mrf.mxu0
  %v317 = vadd.f32 %v270, %v316
  %318 = vdwg.mxu0
  %324 = vrot.lane.b32.xlu0 %v305, 96
  %v325 = vpop.permute.xlu0 %324
  %326 = vrot.lane.b32.xlu0 %v308, 96
  %v327 = vpop.permute.xlu0 %326
  %328 = vrot.lane.b32.xlu0 %v311, 96
  %v329 = vpop.permute.xlu0 %328
  %330 = vrot.lane.b32.xlu0 %v314, 96
  %v331 = vpop.permute.xlu0 %330
  %332 = vrot.lane.b32.xlu0 %v317, 96
  %v333 = vpop.permute.xlu0 %332
  %vm334 = vcmask 130048
  %v335 = vsel %vm334, %v305, 0
  %v337 = vsel %vm334, %v308, 0
  %v339 = vsel %vm334, %v311, 0
  %v341 = vsel %vm334, %v314, 0
  %v343 = vsel %vm334, %v317, 0
  %v345 = vsel %vm334, %v325, 0
  %v347 = vsel %vm334, %v327, 0
  %v349 = vsel %vm334, %v329, 0
  %v351 = vsel %vm334, %v331, 0
  %v353 = vsel %vm334, %v333, 0
  %355 = vmatpush.xpose.msra.mxu0 0.0
  %356 = vmatpush.xpose.msra.mxu0 0.0
  %357 = vmatpush.xpose.msra.mxu0 0.0
  %358 = vmatpush.xpose.msra.mxu0 0.0
  %359 = vmatpush.xpose.msra.mxu0 0.0
  %360 = vmatpush.xpose.msra.mxu0 0.0
  %361 = vmatpush.xpose.msra.mxu0 0.0
  %362 = vmatpush.xpose.msra.mxu0 0.0
  %363 = vmatpush.xpose.msra.mxu0 0.0
  %364 = vmatpush.xpose.msra.mxu0 0.0
  %365 = vmatpush.xpose.msra.mxu0 0.0
  %366 = vmatpush.xpose.msra.mxu0 %v353
  %367 = vmatpush.xpose.msra.mxu0 %v351
  %368 = vmatpush.xpose.msra.mxu0 %v349
  %369 = vmatpush.xpose.msra.mxu0 %v347
  %370 = vmatpush.xpose.msra.mxu0 %v345
  %371 = vmatmul.f32.gmra.mxu0 %v335
  %v372 = vpop.f32.mrf.mxu0
  %v373 = vadd.f32 0.0, %v372
  %374 = vmatmul.f32.gmra.mxu0 %v337
  %v375 = vpop.f32.mrf.mxu0
  %v376 = vadd.f32 0.0, %v375
  %377 = vmatmul.f32.gmra.mxu0 %v339
  %v378 = vpop.f32.mrf.mxu0
  %v379 = vadd.f32 0.0, %v378
  %380 = vmatmul.f32.gmra.mxu0 %v341
  %v381 = vpop.f32.mrf.mxu0
  %v382 = vadd.f32 0.0, %v381
  %383 = vmatmul.f32.gmra.mxu0 %v343
  %v384 = vpop.f32.mrf.mxu0
  %v385 = vadd.f32 0.0, %v384
  %386 = vdwg.mxu0
  %v387 = vmul.f32 %v373, 0.25
  %v388 = vmul.f32 %v376, 0.25
  %v389 = vmul.f32 %v379, 0.25
  %v390 = vmul.f32 %v382, 0.25
  %v391 = vmul.f32 %v385, 0.25
  %v392 = vadd.f32 %v387, %v123
  %v393 = vadd.f32 %v388, %v124
  %v394 = vadd.f32 %v389, %v125
  %v395 = vadd.f32 %v390, %v126
  %v396 = vadd.f32 %v391, %v127
  %vm397 = vcmask 277504
  %v398 = vsel %vm397, %v392, -inf
  %399 = vmax.xlane.f32.xlu0 %v398
  %v400 = vpop.xlane.xlu0 %399
  %v401 = vsel %vm397, %v393, -inf
  %402 = vmax.xlane.f32.xlu0 %v401
  %v403 = vpop.xlane.xlu0 %402
  %v404 = vsel %vm397, %v394, -inf
  %405 = vmax.xlane.f32.xlu0 %v404
  %v406 = vpop.xlane.xlu0 %405
  %v407 = vsel %vm397, %v395, -inf
  %408 = vmax.xlane.f32.xlu0 %v407
  %v409 = vpop.xlane.xlu0 %408
  %vm410 = vcmask 271360
  %v411 = vsel %vm410, %v396, -inf
  %412 = vmax.xlane.f32.xlu0 %v411
  %v413 = vpop.xlane.xlu0 %412
  %v414 = vsub.f32 %v392, %v400
  %v415 = vsub.f32 %v393, %v403
  %v416 = vsub.f32 %v394, %v406
  %v417 = vsub.f32 %v395, %v409
  %v418 = vsub.f32 %v396, %v413
  %v419 = vmul.f32 %v414, 1.442695
  %v420 = vpow.pop %v419
  %v421 = vmul.f32 %v415, 1.442695
  %v422 = vpow.pop %v421
  %v423 = vmul.f32 %v416, 1.442695
  %v424 = vpow.pop %v423
  %v425 = vmul.f32 %v417, 1.442695
  %v426 = vpow.pop %v425
  %v427 = vmul.f32 %v418, 1.442695
  %v428 = vpow.pop %v427
  %v429 = vsel %vm397, %v420, 0.0
  %430 = vadd.xlane.f32.xlu0 %v429
  %v431 = vpop.xlane.xlu0 %430
  %v432 = vsel %vm397, %v422, 0.0
  %433 = vadd.xlane.f32.xlu0 %v432
  %v434 = vpop.xlane.xlu0 %433
  %v435 = vsel %vm397, %v424, 0.0
  %436 = vadd.xlane.f32.xlu0 %v435
  %v437 = vpop.xlane.xlu0 %436
  %v438 = vsel %vm397, %v426, 0.0
  %439 = vadd.xlane.f32.xlu0 %v438
  %v440 = vpop.xlane.xlu0 %439
  %v441 = vsel %vm410, %v428, 0.0
  %442 = vadd.xlane.f32.xlu0 %v441
  %v443 = vpop.xlane.xlu0 %442
  %v444 = vrcp.pop %v431
  %v445 = vmul.f32 %v431, %v444
  %v446 = vsub.f32 1.0, %v445
  %v447 = vmul.f32 %v444, %v446
  %v448 = vadd.f32 %v444, %v447
  %vm449 = vweird.f32 %v431
  %vm450 = vweird.f32 %v444
  %vm451 = vmor %vm449, %vm450
  %v452 = vsel %vm451, %v444, %v448
  %v453 = vand.u32 2147483647, %v431
  %vm454 = vcmp.eq.f32.partialorder %v453, 8.507059e+37
  %v455 = vand.u32 %v431, 2147483648
  %v456 = vor.u32 1.1754944e-38, %v455
  %v457 = vsel %vm454, %v456, %v452
  %v458 = vmul.f32 %v420, %v457
  %v459 = vrcp.pop %v434
  %v460 = vmul.f32 %v434, %v459
  %v461 = vsub.f32 1.0, %v460
  %v462 = vmul.f32 %v459, %v461
  %v463 = vadd.f32 %v459, %v462
  %vm464 = vweird.f32 %v434
  %vm465 = vweird.f32 %v459
  %vm466 = vmor %vm464, %vm465
  %v467 = vsel %vm466, %v459, %v463
  %v468 = vand.u32 2147483647, %v434
  %vm469 = vcmp.eq.f32.partialorder %v468, 8.507059e+37
  %v470 = vand.u32 %v434, 2147483648
  %v471 = vor.u32 1.1754944e-38, %v470
  %v472 = vsel %vm469, %v471, %v467
  %v473 = vmul.f32 %v422, %v472
  %v474 = vrcp.pop %v437
  %v475 = vmul.f32 %v437, %v474
  %v476 = vsub.f32 1.0, %v475
  %v477 = vmul.f32 %v474, %v476
  %v478 = vadd.f32 %v474, %v477
  %vm479 = vweird.f32 %v437
  %vm480 = vweird.f32 %v474
  %vm481 = vmor %vm479, %vm480
  %v482 = vsel %vm481, %v474, %v478
  %v483 = vand.u32 2147483647, %v437
  %vm484 = vcmp.eq.f32.partialorder %v483, 8.507059e+37
  %v485 = vand.u32 %v437, 2147483648
  %v486 = vor.u32 1.1754944e-38, %v485
  %v487 = vsel %vm484, %v486, %v482
  %v488 = vmul.f32 %v424, %v487
  %v489 = vrcp.pop %v440
  %v490 = vmul.f32 %v440, %v489
  %v491 = vsub.f32 1.0, %v490
  %v492 = vmul.f32 %v489, %v491
  %v493 = vadd.f32 %v489, %v492
  %vm494 = vweird.f32 %v440
  %vm495 = vweird.f32 %v489
  %vm496 = vmor %vm494, %vm495
  %v497 = vsel %vm496, %v489, %v493
  %v498 = vand.u32 2147483647, %v440
  %vm499 = vcmp.eq.f32.partialorder %v498, 8.507059e+37
  %v500 = vand.u32 %v440, 2147483648
  %v501 = vor.u32 1.1754944e-38, %v500
  %v502 = vsel %vm499, %v501, %v497
  %v503 = vmul.f32 %v426, %v502
  %v504 = vrcp.pop %v443
  %v505 = vmul.f32 %v443, %v504
  %v506 = vsub.f32 1.0, %v505
  %v507 = vmul.f32 %v504, %v506
  %v508 = vadd.f32 %v504, %v507
  %vm509 = vweird.f32 %v443
  %vm510 = vweird.f32 %v504
  %vm511 = vmor %vm509, %vm510
  %v512 = vsel %vm511, %v504, %v508
  %v513 = vand.u32 2147483647, %v443
  %vm514 = vcmp.eq.f32.partialorder %v513, 8.507059e+37
  %v515 = vand.u32 %v443, 2147483648
  %v516 = vor.u32 1.1754944e-38, %v515
  %v517 = vsel %vm514, %v516, %v512
  %v518 = vmul.f32 %v428, %v517
  %519 = vrot.lane.b32.xlu0 %v305, 64
  %v520 = vpop.permute.xlu0 %519
  %521 = vrot.lane.b32.xlu0 %v308, 64
  %v522 = vpop.permute.xlu0 %521
  %523 = vrot.lane.b32.xlu0 %v311, 64
  %v524 = vpop.permute.xlu0 %523
  %525 = vrot.lane.b32.xlu0 %v314, 64
  %v526 = vpop.permute.xlu0 %525
  %527 = vrot.lane.b32.xlu0 %v317, 64
  %v528 = vpop.permute.xlu0 %527
  %v534 = vsel %vm397, %v458, 0
  %v537 = vsel %vm397, %v473, 0
  %v540 = vsel %vm397, %v488, 0
  %v543 = vsel %vm397, %v503, 0
  %v546 = vsel %vm397, %v518, 0
  %vm548 = vcmask 1041408
  %v549 = vsel %vm548, %v528, 0
  %551 = vmatpush.msra.mxu0 0.0
  %552 = vmatpush.msra.mxu0 0.0
  %553 = vmatpush.msra.mxu0 0.0
  %554 = vmatpush.msra.mxu0 0.0
  %555 = vmatpush.msra.mxu0 0.0
  %556 = vmatpush.msra.mxu0 0.0
  %557 = vmatpush.msra.mxu0 0.0
  %558 = vmatpush.msra.mxu0 0.0
  %559 = vmatpush.msra.mxu0 0.0
  %560 = vmatpush.msra.mxu0 0.0
  %561 = vmatpush.msra.mxu0 0.0
  %562 = vmatpush.msra.mxu0 %v549
  %563 = vmatpush.msra.mxu0 %v526
  %564 = vmatpush.msra.mxu0 %v524
  %565 = vmatpush.msra.mxu0 %v522
  %566 = vmatpush.msra.mxu0 %v520
  %567 = vmatmul.f32.gmra.mxu0 %v534
  %v568 = vpop.f32.mrf.mxu0
  %v569 = vadd.f32 0.0, %v568
  %570 = vmatmul.f32.gmra.mxu0 %v537
  %v571 = vpop.f32.mrf.mxu0
  %v572 = vadd.f32 0.0, %v571
  %573 = vmatmul.f32.gmra.mxu0 %v540
  %v574 = vpop.f32.mrf.mxu0
  %v575 = vadd.f32 0.0, %v574
  %576 = vmatmul.f32.gmra.mxu0 %v543
  %v577 = vpop.f32.mrf.mxu0
  %v578 = vadd.f32 0.0, %v577
  %579 = vmatmul.f32.gmra.mxu0 %v546
  %v580 = vpop.f32.mrf.mxu0
  %v581 = vadd.f32 0.0, %v580
  %582 = vdwg.mxu0
  %583 = vrot.lane.b32.xlu0 %v305, 112
  %v584 = vpop.permute.xlu0 %583
  %585 = vrot.lane.b32.xlu0 %v308, 112
  %v586 = vpop.permute.xlu0 %585
  %587 = vrot.lane.b32.xlu0 %v311, 112
  %v588 = vpop.permute.xlu0 %587
  %589 = vrot.lane.b32.xlu0 %v314, 112
  %v590 = vpop.permute.xlu0 %589
  %591 = vrot.lane.b32.xlu0 %v317, 112
  %v592 = vpop.permute.xlu0 %591
  %593 = vrot.lane.b32.xlu0 %v305, 80
  %v594 = vpop.permute.xlu0 %593
  %595 = vrot.lane.b32.xlu0 %v308, 80
  %v596 = vpop.permute.xlu0 %595
  %597 = vrot.lane.b32.xlu0 %v311, 80
  %v598 = vpop.permute.xlu0 %597
  %599 = vrot.lane.b32.xlu0 %v314, 80
  %v600 = vpop.permute.xlu0 %599
  %601 = vrot.lane.b32.xlu0 %v317, 80
  %v602 = vpop.permute.xlu0 %601
  %v603 = vsel %vm334, %v584, 0
  %v605 = vsel %vm334, %v586, 0
  %v607 = vsel %vm334, %v588, 0
  %v609 = vsel %vm334, %v590, 0
  %v611 = vsel %vm334, %v592, 0
  %v613 = vsel %vm334, %v594, 0
  %v615 = vsel %vm334, %v596, 0
  %v617 = vsel %vm334, %v598, 0
  %v619 = vsel %vm334, %v600, 0
  %v621 = vsel %vm334, %v602, 0
  %623 = vmatpush.xpose.msra.mxu0 0.0
  %624 = vmatpush.xpose.msra.mxu0 0.0
  %625 = vmatpush.xpose.msra.mxu0 0.0
  %626 = vmatpush.xpose.msra.mxu0 0.0
  %627 = vmatpush.xpose.msra.mxu0 0.0
  %628 = vmatpush.xpose.msra.mxu0 0.0
  %629 = vmatpush.xpose.msra.mxu0 0.0
  %630 = vmatpush.xpose.msra.mxu0 0.0
  %631 = vmatpush.xpose.msra.mxu0 0.0
  %632 = vmatpush.xpose.msra.mxu0 0.0
  %633 = vmatpush.xpose.msra.mxu0 0.0
  %634 = vmatpush.xpose.msra.mxu0 %v621
  %635 = vmatpush.xpose.msra.mxu0 %v619
  %636 = vmatpush.xpose.msra.mxu0 %v617
  %637 = vmatpush.xpose.msra.mxu0 %v615
  %638 = vmatpush.xpose.msra.mxu0 %v613
  %639 = vmatmul.f32.gmra.mxu0 %v603
  %v640 = vpop.f32.mrf.mxu0
  %v641 = vadd.f32 0.0, %v640
  %642 = vmatmul.f32.gmra.mxu0 %v605
  %v643 = vpop.f32.mrf.mxu0
  %v644 = vadd.f32 0.0, %v643
  %645 = vmatmul.f32.gmra.mxu0 %v607
  %v646 = vpop.f32.mrf.mxu0
  %v647 = vadd.f32 0.0, %v646
  %648 = vmatmul.f32.gmra.mxu0 %v609
  %v649 = vpop.f32.mrf.mxu0
  %v650 = vadd.f32 0.0, %v649
  %651 = vmatmul.f32.gmra.mxu0 %v611
  %v652 = vpop.f32.mrf.mxu0
  %v653 = vadd.f32 0.0, %v652
  %654 = vdwg.mxu0
  %v655 = vmul.f32 %v641, 0.25
  %v656 = vmul.f32 %v644, 0.25
  %v657 = vmul.f32 %v647, 0.25
  %v658 = vmul.f32 %v650, 0.25
  %v659 = vmul.f32 %v653, 0.25
  %v660 = vadd.f32 %v655, %v123
  %v661 = vadd.f32 %v656, %v124
  %v662 = vadd.f32 %v657, %v125
  %v663 = vadd.f32 %v658, %v126
  %v664 = vadd.f32 %v659, %v127
  %v665 = vsel %vm397, %v660, -inf
  %666 = vmax.xlane.f32.xlu0 %v665
  %v667 = vpop.xlane.xlu0 %666
  %v668 = vsel %vm397, %v661, -inf
  %669 = vmax.xlane.f32.xlu0 %v668
  %v670 = vpop.xlane.xlu0 %669
  %v671 = vsel %vm397, %v662, -inf
  %672 = vmax.xlane.f32.xlu0 %v671
  %v673 = vpop.xlane.xlu0 %672
  %v674 = vsel %vm397, %v663, -inf
  %675 = vmax.xlane.f32.xlu0 %v674
  %v676 = vpop.xlane.xlu0 %675
  %v677 = vsel %vm410, %v664, -inf
  %678 = vmax.xlane.f32.xlu0 %v677
  %v679 = vpop.xlane.xlu0 %678
  %v680 = vsub.f32 %v660, %v667
  %v681 = vsub.f32 %v661, %v670
  %v682 = vsub.f32 %v662, %v673
  %v683 = vsub.f32 %v663, %v676
  %v684 = vsub.f32 %v664, %v679
  %v685 = vmul.f32 %v680, 1.442695
  %v686 = vpow.pop %v685
  %v687 = vmul.f32 %v681, 1.442695
  %v688 = vpow.pop %v687
  %v689 = vmul.f32 %v682, 1.442695
  %v690 = vpow.pop %v689
  %v691 = vmul.f32 %v683, 1.442695
  %v692 = vpow.pop %v691
  %v693 = vmul.f32 %v684, 1.442695
  %v694 = vpow.pop %v693
  %v695 = vsel %vm397, %v686, 0.0
  %696 = vadd.xlane.f32.xlu0 %v695
  %v697 = vpop.xlane.xlu0 %696
  %v698 = vsel %vm397, %v688, 0.0
  %699 = vadd.xlane.f32.xlu0 %v698
  %v700 = vpop.xlane.xlu0 %699
  %v701 = vsel %vm397, %v690, 0.0
  %702 = vadd.xlane.f32.xlu0 %v701
  %v703 = vpop.xlane.xlu0 %702
  %v704 = vsel %vm397, %v692, 0.0
  %705 = vadd.xlane.f32.xlu0 %v704
  %v706 = vpop.xlane.xlu0 %705
  %v707 = vsel %vm410, %v694, 0.0
  %708 = vadd.xlane.f32.xlu0 %v707
  %v709 = vpop.xlane.xlu0 %708
  %v710 = vrcp.pop %v697
  %v711 = vmul.f32 %v697, %v710
  %v712 = vsub.f32 1.0, %v711
  %v713 = vmul.f32 %v710, %v712
  %v714 = vadd.f32 %v710, %v713
  %vm715 = vweird.f32 %v697
  %vm716 = vweird.f32 %v710
  %vm717 = vmor %vm715, %vm716
  %v718 = vsel %vm717, %v710, %v714
  %v719 = vand.u32 2147483647, %v697
  %vm720 = vcmp.eq.f32.partialorder %v719, 8.507059e+37
  %v721 = vand.u32 %v697, 2147483648
  %v722 = vor.u32 1.1754944e-38, %v721
  %v723 = vsel %vm720, %v722, %v718
  %v724 = vmul.f32 %v686, %v723
  %v725 = vrcp.pop %v700
  %v726 = vmul.f32 %v700, %v725
  %v727 = vsub.f32 1.0, %v726
  %v728 = vmul.f32 %v725, %v727
  %v729 = vadd.f32 %v725, %v728
  %vm730 = vweird.f32 %v700
  %vm731 = vweird.f32 %v725
  %vm732 = vmor %vm730, %vm731
  %v733 = vsel %vm732, %v725, %v729
  %v734 = vand.u32 2147483647, %v700
  %vm735 = vcmp.eq.f32.partialorder %v734, 8.507059e+37
  %v736 = vand.u32 %v700, 2147483648
  %v737 = vor.u32 1.1754944e-38, %v736
  %v738 = vsel %vm735, %v737, %v733
  %v739 = vmul.f32 %v688, %v738
  %v740 = vrcp.pop %v703
  %v741 = vmul.f32 %v703, %v740
  %v742 = vsub.f32 1.0, %v741
  %v743 = vmul.f32 %v740, %v742
  %v744 = vadd.f32 %v740, %v743
  %vm745 = vweird.f32 %v703
  %vm746 = vweird.f32 %v740
  %vm747 = vmor %vm745, %vm746
  %v748 = vsel %vm747, %v740, %v744
  %v749 = vand.u32 2147483647, %v703
  %vm750 = vcmp.eq.f32.partialorder %v749, 8.507059e+37
  %v751 = vand.u32 %v703, 2147483648
  %v752 = vor.u32 1.1754944e-38, %v751
  %v753 = vsel %vm750, %v752, %v748
  %v754 = vmul.f32 %v690, %v753
  %v755 = vrcp.pop %v706
  %v756 = vmul.f32 %v706, %v755
  %v757 = vsub.f32 1.0, %v756
  %v758 = vmul.f32 %v755, %v757
  %v759 = vadd.f32 %v755, %v758
  %vm760 = vweird.f32 %v706
  %vm761 = vweird.f32 %v755
  %vm762 = vmor %vm760, %vm761
  %v763 = vsel %vm762, %v755, %v759
  %v764 = vand.u32 2147483647, %v706
  %vm765 = vcmp.eq.f32.partialorder %v764, 8.507059e+37
  %v766 = vand.u32 %v706, 2147483648
  %v767 = vor.u32 1.1754944e-38, %v766
  %v768 = vsel %vm765, %v767, %v763
  %v769 = vmul.f32 %v692, %v768
  %v770 = vrcp.pop %v709
  %v771 = vmul.f32 %v709, %v770
  %v772 = vsub.f32 1.0, %v771
  %v773 = vmul.f32 %v770, %v772
  %v774 = vadd.f32 %v770, %v773
  %vm775 = vweird.f32 %v709
  %vm776 = vweird.f32 %v770
  %vm777 = vmor %vm775, %vm776
  %v778 = vsel %vm777, %v770, %v774
  %v779 = vand.u32 2147483647, %v709
  %vm780 = vcmp.eq.f32.partialorder %v779, 8.507059e+37
  %v781 = vand.u32 %v709, 2147483648
  %v782 = vor.u32 1.1754944e-38, %v781
  %v783 = vsel %vm780, %v782, %v778
  %v784 = vmul.f32 %v694, %v783
  %785 = vrot.lane.b32.xlu0 %v305, 48
  %v786 = vpop.permute.xlu0 %785
  %787 = vrot.lane.b32.xlu0 %v308, 48
  %v788 = vpop.permute.xlu0 %787
  %789 = vrot.lane.b32.xlu0 %v311, 48
  %v790 = vpop.permute.xlu0 %789
  %791 = vrot.lane.b32.xlu0 %v314, 48
  %v792 = vpop.permute.xlu0 %791
  %793 = vrot.lane.b32.xlu0 %v317, 48
  %v794 = vpop.permute.xlu0 %793
  %v800 = vsel %vm397, %v724, 0
  %v803 = vsel %vm397, %v739, 0
  %v806 = vsel %vm397, %v754, 0
  %v809 = vsel %vm397, %v769, 0
  %v812 = vsel %vm397, %v784, 0
  %v814 = vsel %vm548, %v794, 0
  %816 = vmatpush.msra.mxu0 0.0
  %817 = vmatpush.msra.mxu0 0.0
  %818 = vmatpush.msra.mxu0 0.0
  %819 = vmatpush.msra.mxu0 0.0
  %820 = vmatpush.msra.mxu0 0.0
  %821 = vmatpush.msra.mxu0 0.0
  %822 = vmatpush.msra.mxu0 0.0
  %823 = vmatpush.msra.mxu0 0.0
  %824 = vmatpush.msra.mxu0 0.0
  %825 = vmatpush.msra.mxu0 0.0
  %826 = vmatpush.msra.mxu0 0.0
  %827 = vmatpush.msra.mxu0 %v814
  %828 = vmatpush.msra.mxu0 %v792
  %829 = vmatpush.msra.mxu0 %v790
  %830 = vmatpush.msra.mxu0 %v788
  %831 = vmatpush.msra.mxu0 %v786
  %832 = vmatmul.f32.gmra.mxu0 %v800
  %v833 = vpop.f32.mrf.mxu0
  %v834 = vadd.f32 0.0, %v833
  %835 = vmatmul.f32.gmra.mxu0 %v803
  %v836 = vpop.f32.mrf.mxu0
  %v837 = vadd.f32 0.0, %v836
  %838 = vmatmul.f32.gmra.mxu0 %v806
  %v839 = vpop.f32.mrf.mxu0
  %v840 = vadd.f32 0.0, %v839
  %841 = vmatmul.f32.gmra.mxu0 %v809
  %v842 = vpop.f32.mrf.mxu0
  %v843 = vadd.f32 0.0, %v842
  %844 = vmatmul.f32.gmra.mxu0 %v812
  %v845 = vpop.f32.mrf.mxu0
  %v846 = vadd.f32 0.0, %v845
  %847 = vdwg.mxu0
  %v849 = vsel %vm334, %v834, 0
  %v852 = vsel %vm334, %v837, 0
  %v855 = vsel %vm334, %v840, 0
  %v858 = vsel %vm334, %v843, 0
  %v861 = vsel %vm334, %v846, 0
  %863 = vmatpush.msra.mxu0 0.0
  %864 = vmatpush.msra.mxu0 0.0
  %865 = vmatpush.msra.mxu0 0.0
  %866 = vmatpush.msra.mxu0 0.0
  %867 = vmatpush.msra.mxu0 0.0
  %868 = vmatpush.msra.mxu0 0.0
  %869 = vmatpush.msra.mxu0 0.0
  %870 = vmatpush.msra.mxu0 0.0
  %871 = vmatpush.msra.mxu0 0.0
  %872 = vmatpush.msra.mxu0 0.0
  %873 = vmatpush.msra.mxu0 0.0
  %874 = vmatpush.msra.mxu0 0.0
  %875 = vmatpush.msra.mxu0 0.0
  %876 = vmatpush.msra.mxu0 0.0
  %877 = vmatpush.msra.mxu0 %v132
  %878 = vmatpush.msra.mxu0 %v131
  %879 = vmatmul.f32.gmra.mxu0 %v849
  %v880 = vpop.f32.mrf.mxu0
  %v881 = vadd.f32 0.0, %v880
  %882 = vmatmul.f32.gmra.mxu0 %v852
  %v883 = vpop.f32.mrf.mxu0
  %v884 = vadd.f32 0.0, %v883
  %885 = vmatmul.f32.gmra.mxu0 %v855
  %v886 = vpop.f32.mrf.mxu0
  %v887 = vadd.f32 0.0, %v886
  %888 = vmatmul.f32.gmra.mxu0 %v858
  %v889 = vpop.f32.mrf.mxu0
  %v890 = vadd.f32 0.0, %v889
  %891 = vmatmul.f32.gmra.mxu0 %v861
  %v892 = vpop.f32.mrf.mxu0
  %v893 = vadd.f32 0.0, %v892
  %894 = vdwg.mxu0
  %v896 = vsel %vm334, %v569, 0
  %v899 = vsel %vm334, %v572, 0
  %v902 = vsel %vm334, %v575, 0
  %v905 = vsel %vm334, %v578, 0
  %v908 = vsel %vm334, %v581, 0
  %910 = vmatpush.msra.mxu0 0.0
  %911 = vmatpush.msra.mxu0 0.0
  %912 = vmatpush.msra.mxu0 0.0
  %913 = vmatpush.msra.mxu0 0.0
  %914 = vmatpush.msra.mxu0 0.0
  %915 = vmatpush.msra.mxu0 0.0
  %916 = vmatpush.msra.mxu0 0.0
  %917 = vmatpush.msra.mxu0 0.0
  %918 = vmatpush.msra.mxu0 0.0
  %919 = vmatpush.msra.mxu0 0.0
  %920 = vmatpush.msra.mxu0 0.0
  %921 = vmatpush.msra.mxu0 0.0
  %922 = vmatpush.msra.mxu0 0.0
  %923 = vmatpush.msra.mxu0 0.0
  %924 = vmatpush.msra.mxu0 %v130
  %925 = vmatpush.msra.mxu0 %v129
  %926 = vmatmul.f32.gmra.mxu0 %v896
  %v927 = vpop.f32.mrf.mxu0
  %v928 = vadd.f32 %v881, %v927
  %929 = vmatmul.f32.gmra.mxu0 %v899
  %v930 = vpop.f32.mrf.mxu0
  %v931 = vadd.f32 %v884, %v930
  %932 = vmatmul.f32.gmra.mxu0 %v902
  %v933 = vpop.f32.mrf.mxu0
  %v934 = vadd.f32 %v887, %v933
  %935 = vmatmul.f32.gmra.mxu0 %v905
  %v936 = vpop.f32.mrf.mxu0
  %v937 = vadd.f32 %v890, %v936
  %938 = vmatmul.f32.gmra.mxu0 %v908
  %v939 = vpop.f32.mrf.mxu0
  %v940 = vadd.f32 %v893, %v939
  %941 = vdwg.mxu0
  %v942 = vadd.f32 %v118, %v928
  %v943 = vadd.f32 %v119, %v931
  %v944 = vadd.f32 %v120, %v934
  %v945 = vadd.f32 %v121, %v937
  %v946 = vadd.f32 %v122, %v940
  %v947 = vperm.slane %v128, 4
  %v948 = vadd.f32 %v942, %v947
  %v949 = vadd.f32 %v943, %v947
  %v950 = vadd.f32 %v944, %v947
  %v951 = vadd.f32 %v945, %v947
  %v952 = vadd.f32 %v946, %v947
  %v953 = vsel %vm133, %v948, 0.0
  %954 = vadd.xlane.f32.xlu0 %v953
  %v955 = vpop.xlane.xlu0 %954
  %v956 = vsel %vm133, %v949, 0.0
  %957 = vadd.xlane.f32.xlu0 %v956
  %v958 = vpop.xlane.xlu0 %957
  %v959 = vsel %vm133, %v950, 0.0
  %960 = vadd.xlane.f32.xlu0 %v959
  %v961 = vpop.xlane.xlu0 %960
  %v962 = vsel %vm133, %v951, 0.0
  %963 = vadd.xlane.f32.xlu0 %v962
  %v964 = vpop.xlane.xlu0 %963
  %v965 = vsel %vm146, %v952, 0.0
  %966 = vadd.xlane.f32.xlu0 %v965
  %v967 = vpop.xlane.xlu0 %966
  %v968 = vmul.f32 %v955, %v156
  %v969 = vmul.f32 %v958, %v156
  %v970 = vmul.f32 %v961, %v156
  %v971 = vmul.f32 %v964, %v156
  %v972 = vmul.f32 %v967, %v156
  %v973 = vsub.f32 %v948, %v968
  %v974 = vsub.f32 %v949, %v969
  %v975 = vsub.f32 %v950, %v970
  %v976 = vsub.f32 %v951, %v971
  %v977 = vsub.f32 %v952, %v972
  %v978 = vmul.f32 %v973, %v973
  %v979 = vmul.f32 %v974, %v974
  %v980 = vmul.f32 %v975, %v975
  %v981 = vmul.f32 %v976, %v976
  %v982 = vmul.f32 %v977, %v977
  %v983 = vsel %vm133, %v978, 0.0
  %984 = vadd.xlane.f32.xlu0 %v983
  %v985 = vpop.xlane.xlu0 %984
  %v986 = vsel %vm133, %v979, 0.0
  %987 = vadd.xlane.f32.xlu0 %v986
  %v988 = vpop.xlane.xlu0 %987
  %v989 = vsel %vm133, %v980, 0.0
  %990 = vadd.xlane.f32.xlu0 %v989
  %v991 = vpop.xlane.xlu0 %990
  %v992 = vsel %vm133, %v981, 0.0
  %993 = vadd.xlane.f32.xlu0 %v992
  %v994 = vpop.xlane.xlu0 %993
  %v995 = vsel %vm146, %v982, 0.0
  %996 = vadd.xlane.f32.xlu0 %v995
  %v997 = vpop.xlane.xlu0 %996
  %v998 = vmul.f32 %v985, %v156
  %v999 = vmul.f32 %v988, %v156
  %v1000 = vmul.f32 %v991, %v156
  %v1001 = vmul.f32 %v994, %v156
  %v1002 = vmul.f32 %v997, %v156
  %v1003 = vadd.f32 %v998, 1e-12
  %v1004 = vadd.f32 %v999, 1e-12
  %v1005 = vadd.f32 %v1000, 1e-12
  %v1006 = vadd.f32 %v1001, 1e-12
  %v1007 = vadd.f32 %v1002, 1e-12
  %v1008 = vrsqrt.pop %v1003
  %v1009 = vmul.f32 %v1008, %v1003
  %v1010 = vmul.f32 %v1009, %v1008
  %v1011 = vmul.f32 0.5, %v1010
  %v1012 = vsub.f32 1.5, %v1011
  %v1013 = vmul.f32 %v1008, %v1012
  %vm1014 = vweird.f32 %v1003
  %vm1015 = vweird.f32 %v1008
  %vm1016 = vmor %vm1014, %vm1015
  %v1017 = vsel %vm1016, %v1008, %v1013
  %v1018 = vrsqrt.pop %v1004
  %v1019 = vmul.f32 %v1018, %v1004
  %v1020 = vmul.f32 %v1019, %v1018
  %v1021 = vmul.f32 0.5, %v1020
  %v1022 = vsub.f32 1.5, %v1021
  %v1023 = vmul.f32 %v1018, %v1022
  %vm1024 = vweird.f32 %v1004
  %vm1025 = vweird.f32 %v1018
  %vm1026 = vmor %vm1024, %vm1025
  %v1027 = vsel %vm1026, %v1018, %v1023
  %v1028 = vrsqrt.pop %v1005
  %v1029 = vmul.f32 %v1028, %v1005
  %v1030 = vmul.f32 %v1029, %v1028
  %v1031 = vmul.f32 0.5, %v1030
  %v1032 = vsub.f32 1.5, %v1031
  %v1033 = vmul.f32 %v1028, %v1032
  %vm1034 = vweird.f32 %v1005
  %vm1035 = vweird.f32 %v1028
  %vm1036 = vmor %vm1034, %vm1035
  %v1037 = vsel %vm1036, %v1028, %v1033
  %v1038 = vrsqrt.pop %v1006
  %v1039 = vmul.f32 %v1038, %v1006
  %v1040 = vmul.f32 %v1039, %v1038
  %v1041 = vmul.f32 0.5, %v1040
  %v1042 = vsub.f32 1.5, %v1041
  %v1043 = vmul.f32 %v1038, %v1042
  %vm1044 = vweird.f32 %v1006
  %vm1045 = vweird.f32 %v1038
  %vm1046 = vmor %vm1044, %vm1045
  %v1047 = vsel %vm1046, %v1038, %v1043
  %v1048 = vrsqrt.pop %v1007
  %v1049 = vmul.f32 %v1048, %v1007
  %v1050 = vmul.f32 %v1049, %v1048
  %v1051 = vmul.f32 0.5, %v1050
  %v1052 = vsub.f32 1.5, %v1051
  %v1053 = vmul.f32 %v1048, %v1052
  %vm1054 = vweird.f32 %v1007
  %vm1055 = vweird.f32 %v1048
  %vm1056 = vmor %vm1054, %vm1055
  %v1057 = vsel %vm1056, %v1048, %v1053
  %v1058 = vmul.f32 %v973, %v1017
  %v1059 = vmul.f32 %v974, %v1027
  %v1060 = vmul.f32 %v975, %v1037
  %v1061 = vmul.f32 %v976, %v1047
  %v1062 = vmul.f32 %v977, %v1057
  %v1063 = vperm.slane %v128, 2
  %v1064 = vmul.f32 %v1058, %v1063
  %v1065 = vmul.f32 %v1059, %v1063
  %v1066 = vmul.f32 %v1060, %v1063
  %v1067 = vmul.f32 %v1061, %v1063
  %v1068 = vmul.f32 %v1062, %v1063
  %v1069 = vperm.slane %v128, 3
  %v1070 = vadd.f32 %v1064, %v1069
  %v1071 = vadd.f32 %v1065, %v1069
  %v1072 = vadd.f32 %v1066, %v1069
  %v1073 = vadd.f32 %v1067, %v1069
  %v1074 = vadd.f32 %v1068, %v1069
  %v1075 = vld [vmem:[%s9] sm:$0xff]
  %v1076 = vld [vmem:[%s9 + $0x8] sm:$0xff]
  %v1077 = vld [vmem:[%s9 + $0x10] sm:$0xff]
  %v1078 = vld [vmem:[%s9 + $0x18] sm:$0xff]
  %v1079 = vld [vmem:[%s10] sm:$0x1]
  %v1081 = vperm.slane %v1079, 0
  %v1084 = vsel %vm133, %v1070, 0
  %v1087 = vsel %vm133, %v1071, 0
  %v1090 = vsel %vm133, %v1072, 0
  %v1093 = vsel %vm133, %v1073, 0
  %v1096 = vsel %vm133, %v1074, 0
  %1098 = vmatpush.msra.mxu0 0.0
  %1099 = vmatpush.msra.mxu0 0.0
  %1100 = vmatpush.msra.mxu0 0.0
  %1101 = vmatpush.msra.mxu0 0.0
  %1102 = vmatpush.msra.mxu0 0.0
  %1103 = vmatpush.msra.mxu0 0.0
  %1104 = vmatpush.msra.mxu0 0.0
  %1105 = vmatpush.msra.mxu0 0.0
  %1106 = vmatpush.msra.mxu0 0.0
  %1107 = vmatpush.msra.mxu0 0.0
  %1108 = vmatpush.msra.mxu0 0.0
  %1109 = vmatpush.msra.mxu0 0.0
  %1110 = vmatpush.msra.mxu0 %v1078
  %1111 = vmatpush.msra.mxu0 %v1077
  %1112 = vmatpush.msra.mxu0 %v1076
  %1113 = vmatpush.msra.mxu0 %v1075
  %1114 = vmatmul.f32.gmra.mxu0 %v1084
  %v1115 = vpop.f32.mrf.mxu0
  %v1116 = vadd.f32 %v1081, %v1115
  %1117 = vmatmul.f32.gmra.mxu0 %v1087
  %v1118 = vpop.f32.mrf.mxu0
  %v1119 = vadd.f32 %v1081, %v1118
  %1120 = vmatmul.f32.gmra.mxu0 %v1090
  %v1121 = vpop.f32.mrf.mxu0
  %v1122 = vadd.f32 %v1081, %v1121
  %1123 = vmatmul.f32.gmra.mxu0 %v1093
  %v1124 = vpop.f32.mrf.mxu0
  %v1125 = vadd.f32 %v1081, %v1124
  %1126 = vmatmul.f32.gmra.mxu0 %v1096
  %v1127 = vpop.f32.mrf.mxu0
  %v1128 = vadd.f32 %v1081, %v1127
  %1129 = vdwg.mxu0
  %v1130 = vmul.f32 %v1116, %v1116
  %v1131 = vmul.f32 %v1119, %v1119
  %v1132 = vmul.f32 %v1122, %v1122
  %v1133 = vmul.f32 %v1125, %v1125
  %v1134 = vmul.f32 %v1128, %v1128
  %v1135 = vmul.f32 %v1116, %v1130
  %v1136 = vmul.f32 %v1119, %v1131
  %v1137 = vmul.f32 %v1122, %v1132
  %v1138 = vmul.f32 %v1125, %v1133
  %v1139 = vmul.f32 %v1128, %v1134
  %v1140 = vmul.f32 %v1135, 0.044715
  %v1141 = vmul.f32 %v1136, 0.044715
  %v1142 = vmul.f32 %v1137, 0.044715
  %v1143 = vmul.f32 %v1138, 0.044715
  %v1144 = vmul.f32 %v1139, 0.044715
  %v1145 = vadd.f32 %v1116, %v1140
  %v1146 = vadd.f32 %v1119, %v1141
  %v1147 = vadd.f32 %v1122, %v1142
  %v1148 = vadd.f32 %v1125, %v1143
  %v1149 = vadd.f32 %v1128, %v1144
  %v1150 = vmul.f32 %v1145, 0.7978846
  %v1151 = vmul.f32 %v1146, 0.7978846
  %v1152 = vmul.f32 %v1147, 0.7978846
  %v1153 = vmul.f32 %v1148, 0.7978846
  %v1154 = vmul.f32 %v1149, 0.7978846
  %v1155 = vtanh.pop %v1150
  %v1156 = vtanh.pop %v1151
  %v1157 = vtanh.pop %v1152
  %v1158 = vtanh.pop %v1153
  %v1159 = vtanh.pop %v1154
  %v1160 = vadd.f32 %v1155, 1.0
  %v1161 = vadd.f32 %v1156, 1.0
  %v1162 = vadd.f32 %v1157, 1.0
  %v1163 = vadd.f32 %v1158, 1.0
  %v1164 = vadd.f32 %v1159, 1.0
  %v1165 = vmul.f32 %v1160, 0.5
  %v1166 = vmul.f32 %v1161, 0.5
  %v1167 = vmul.f32 %v1162, 0.5
  %v1168 = vmul.f32 %v1163, 0.5
  %v1169 = vmul.f32 %v1164, 0.5
  %v1170 = vmul.f32 %v1116, %v1165
  %v1171 = vmul.f32 %v1119, %v1166
  %v1172 = vmul.f32 %v1122, %v1167
  %v1173 = vmul.f32 %v1125, %v1168
  %v1174 = vmul.f32 %v1128, %v1169
  %v1175 = vld [vmem:[%s11] sm:$0xff]
  %v1176 = vld [vmem:[%s11 + $0x8] sm:$0xff]
  %v1177 = vld [vmem:[%s11 + $0x10] sm:$0xff]
  %v1178 = vld [vmem:[%s11 + $0x18] sm:$0xff]
  %v1179 = vld [vmem:[%s11 + $0x20] sm:$0xff]
  %v1180 = vld [vmem:[%s11 + $0x28] sm:$0xff]
  %v1181 = vld [vmem:[%s11 + $0x30] sm:$0xff]
  %v1182 = vld [vmem:[%s11 + $0x38] sm:$0xff]
  %v1183 = vld [vmem:[%s11 + $0x40] sm:$0xff]
  %v1184 = vld [vmem:[%s11 + $0x48] sm:$0xff]
  %v1185 = vld [vmem:[%s11 + $0x50] sm:$0xff]
  %v1186 = vld [vmem:[%s11 + $0x58] sm:$0xff]
  %v1187 = vld [vmem:[%s11 + $0x60] sm:$0xff]
  %v1188 = vld [vmem:[%s11 + $0x68] sm:$0xff]
  %v1189 = vld [vmem:[%s11 + $0x70] sm:$0xff]
  %v1190 = vld [vmem:[%s11 + $0x78] sm:$0xff]
  %v1191 = vperm.slane %v128, 5
  %1192 = vmatpush.msra.mxu0 %v1190
  %1193 = vmatpush.msra.mxu0 %v1189
  %1194 = vmatpush.msra.mxu0 %v1188
  %1195 = vmatpush.msra.mxu0 %v1187
  %1196 = vmatpush.msra.mxu0 %v1186
  %1197 = vmatpush.msra.mxu0 %v1185
  %1198 = vmatpush.msra.mxu0 %v1184
  %1199 = vmatpush.msra.mxu0 %v1183
  %1200 = vmatpush.msra.mxu0 %v1182
  %1201 = vmatpush.msra.mxu0 %v1181
  %1202 = vmatpush.msra.mxu0 %v1180
  %1203 = vmatpush.msra.mxu0 %v1179
  %1204 = vmatpush.msra.mxu0 %v1178
  %1205 = vmatpush.msra.mxu0 %v1177
  %1206 = vmatpush.msra.mxu0 %v1176
  %1207 = vmatpush.msra.mxu0 %v1175
  %1208 = vmatmul.f32.gmra.mxu0 %v1170
  %v1209 = vpop.f32.mrf.mxu0
  %v1210 = vadd.f32 %v1191, %v1209
  %1211 = vmatmul.f32.gmra.mxu0 %v1171
  %v1212 = vpop.f32.mrf.mxu0
  %v1213 = vadd.f32 %v1191, %v1212
  %1214 = vmatmul.f32.gmra.mxu0 %v1172
  %v1215 = vpop.f32.mrf.mxu0
  %v1216 = vadd.f32 %v1191, %v1215
  %1217 = vmatmul.f32.gmra.mxu0 %v1173
  %v1218 = vpop.f32.mrf.mxu0
  %v1219 = vadd.f32 %v1191, %v1218
  %1220 = vmatmul.f32.gmra.mxu0 %v1174
  %v1221 = vpop.f32.mrf.mxu0
  %v1222 = vadd.f32 %v1191, %v1221
  %1223 = vdwg.mxu0
  %v1224 = vadd.f32 %v948, %v1210
  %v1225 = vadd.f32 %v949, %v1213
  %v1226 = vadd.f32 %v950, %v1216
  %v1227 = vadd.f32 %v951, %v1219
  %v1228 = vadd.f32 %v952, %v1222
  %s1229 = scalar_lea.vmem %s8, 8
  %v1230 = vld [vmem:[%s1229] sm:$0xff]
  %s1231 = scalar_lea.vmem %s7, 32
  %v1232 = vld [vmem:[%s1231] sm:$0xff]
  %v1233 = vld [vmem:[%s1231 + $0x8] sm:$0xff]
  %v1234 = vld [vmem:[%s1231 + $0x10] sm:$0xff]
  %v1235 = vld [vmem:[%s1231 + $0x18] sm:$0xff]
  %v1236 = vsel %vm133, %v1224, 0.0
  %1237 = vadd.xlane.f32.xlu0 %v1236
  %v1238 = vpop.xlane.xlu0 %1237
  %v1239 = vsel %vm133, %v1225, 0.0
  %1240 = vadd.xlane.f32.xlu0 %v1239
  %v1241 = vpop.xlane.xlu0 %1240
  %v1242 = vsel %vm133, %v1226, 0.0
  %1243 = vadd.xlane.f32.xlu0 %v1242
  %v1244 = vpop.xlane.xlu0 %1243
  %v1245 = vsel %vm133, %v1227, 0.0
  %1246 = vadd.xlane.f32.xlu0 %v1245
  %v1247 = vpop.xlane.xlu0 %1246
  %v1248 = vsel %vm146, %v1228, 0.0
  %1249 = vadd.xlane.f32.xlu0 %v1248
  %v1250 = vpop.xlane.xlu0 %1249
  %v1251 = vmul.f32 %v1238, %v156
  %v1252 = vmul.f32 %v1241, %v156
  %v1253 = vmul.f32 %v1244, %v156
  %v1254 = vmul.f32 %v1247, %v156
  %v1255 = vmul.f32 %v1250, %v156
  %v1256 = vsub.f32 %v1224, %v1251
  %v1257 = vsub.f32 %v1225, %v1252
  %v1258 = vsub.f32 %v1226, %v1253
  %v1259 = vsub.f32 %v1227, %v1254
  %v1260 = vsub.f32 %v1228, %v1255
  %v1261 = vmul.f32 %v1256, %v1256
  %v1262 = vmul.f32 %v1257, %v1257
  %v1263 = vmul.f32 %v1258, %v1258
  %v1264 = vmul.f32 %v1259, %v1259
  %v1265 = vmul.f32 %v1260, %v1260
  %v1266 = vsel %vm133, %v1261, 0.0
  %1267 = vadd.xlane.f32.xlu0 %v1266
  %v1268 = vpop.xlane.xlu0 %1267
  %v1269 = vsel %vm133, %v1262, 0.0
  %1270 = vadd.xlane.f32.xlu0 %v1269
  %v1271 = vpop.xlane.xlu0 %1270
  %v1272 = vsel %vm133, %v1263, 0.0
  %1273 = vadd.xlane.f32.xlu0 %v1272
  %v1274 = vpop.xlane.xlu0 %1273
  %v1275 = vsel %vm133, %v1264, 0.0
  %1276 = vadd.xlane.f32.xlu0 %v1275
  %v1277 = vpop.xlane.xlu0 %1276
  %v1278 = vsel %vm146, %v1265, 0.0
  %1279 = vadd.xlane.f32.xlu0 %v1278
  %v1280 = vpop.xlane.xlu0 %1279
  %v1281 = vmul.f32 %v1268, %v156
  %v1282 = vmul.f32 %v1271, %v156
  %v1283 = vmul.f32 %v1274, %v156
  %v1284 = vmul.f32 %v1277, %v156
  %v1285 = vmul.f32 %v1280, %v156
  %v1286 = vadd.f32 %v1281, 1e-12
  %v1287 = vadd.f32 %v1282, 1e-12
  %v1288 = vadd.f32 %v1283, 1e-12
  %v1289 = vadd.f32 %v1284, 1e-12
  %v1290 = vadd.f32 %v1285, 1e-12
  %v1291 = vrsqrt.pop %v1286
  %v1292 = vmul.f32 %v1291, %v1286
  %v1293 = vmul.f32 %v1292, %v1291
  %v1294 = vmul.f32 0.5, %v1293
  %v1295 = vsub.f32 1.5, %v1294
  %v1296 = vmul.f32 %v1291, %v1295
  %vm1297 = vweird.f32 %v1286
  %vm1298 = vweird.f32 %v1291
  %vm1299 = vmor %vm1297, %vm1298
  %v1300 = vsel %vm1299, %v1291, %v1296
  %v1301 = vrsqrt.pop %v1287
  %v1302 = vmul.f32 %v1301, %v1287
  %v1303 = vmul.f32 %v1302, %v1301
  %v1304 = vmul.f32 0.5, %v1303
  %v1305 = vsub.f32 1.5, %v1304
  %v1306 = vmul.f32 %v1301, %v1305
  %vm1307 = vweird.f32 %v1287
  %vm1308 = vweird.f32 %v1301
  %vm1309 = vmor %vm1307, %vm1308
  %v1310 = vsel %vm1309, %v1301, %v1306
  %v1311 = vrsqrt.pop %v1288
  %v1312 = vmul.f32 %v1311, %v1288
  %v1313 = vmul.f32 %v1312, %v1311
  %v1314 = vmul.f32 0.5, %v1313
  %v1315 = vsub.f32 1.5, %v1314
  %v1316 = vmul.f32 %v1311, %v1315
  %vm1317 = vweird.f32 %v1288
  %vm1318 = vweird.f32 %v1311
  %vm1319 = vmor %vm1317, %vm1318
  %v1320 = vsel %vm1319, %v1311, %v1316
  %v1321 = vrsqrt.pop %v1289
  %v1322 = vmul.f32 %v1321, %v1289
  %v1323 = vmul.f32 %v1322, %v1321
  %v1324 = vmul.f32 0.5, %v1323
  %v1325 = vsub.f32 1.5, %v1324
  %v1326 = vmul.f32 %v1321, %v1325
  %vm1327 = vweird.f32 %v1289
  %vm1328 = vweird.f32 %v1321
  %vm1329 = vmor %vm1327, %vm1328
  %v1330 = vsel %vm1329, %v1321, %v1326
  %v1331 = vrsqrt.pop %v1290
  %v1332 = vmul.f32 %v1331, %v1290
  %v1333 = vmul.f32 %v1332, %v1331
  %v1334 = vmul.f32 0.5, %v1333
  %v1335 = vsub.f32 1.5, %v1334
  %v1336 = vmul.f32 %v1331, %v1335
  %vm1337 = vweird.f32 %v1290
  %vm1338 = vweird.f32 %v1331
  %vm1339 = vmor %vm1337, %vm1338
  %v1340 = vsel %vm1339, %v1331, %v1336
  %v1341 = vmul.f32 %v1256, %v1300
  %v1342 = vmul.f32 %v1257, %v1310
  %v1343 = vmul.f32 %v1258, %v1320
  %v1344 = vmul.f32 %v1259, %v1330
  %v1345 = vmul.f32 %v1260, %v1340
  %v1346 = vperm.slane %v1230, 0
  %v1347 = vmul.f32 %v1341, %v1346
  %v1348 = vmul.f32 %v1342, %v1346
  %v1349 = vmul.f32 %v1343, %v1346
  %v1350 = vmul.f32 %v1344, %v1346
  %v1351 = vmul.f32 %v1345, %v1346
  %v1352 = vperm.slane %v1230, 1
  %v1353 = vadd.f32 %v1347, %v1352
  %v1354 = vadd.f32 %v1348, %v1352
  %v1355 = vadd.f32 %v1349, %v1352
  %v1356 = vadd.f32 %v1350, %v1352
  %v1357 = vadd.f32 %v1351, %v1352
  %s1358 = scalar_lea.vmem %s5, 32
  %v1359 = vld [vmem:[%s1358] sm:$0xff]
  %v1360 = vld [vmem:[%s1358 + $0x8] sm:$0xff]
  %v1361 = vld [vmem:[%s1358 + $0x10] sm:$0xff]
  %v1362 = vld [vmem:[%s1358 + $0x18] sm:$0xff]
  %s1363 = scalar_lea.vmem %s6, 1
  %v1364 = vld [vmem:[%s1363] sm:$0x1]
  %v1366 = vperm.slane %v1364, 0
  %v1369 = vsel %vm133, %v1353, 0
  %v1372 = vsel %vm133, %v1354, 0
  %v1375 = vsel %vm133, %v1355, 0
  %v1378 = vsel %vm133, %v1356, 0
  %v1381 = vsel %vm133, %v1357, 0
  %1383 = vmatpush.msra.mxu0 0.0
  %1384 = vmatpush.msra.mxu0 0.0
  %1385 = vmatpush.msra.mxu0 0.0
  %1386 = vmatpush.msra.mxu0 0.0
  %1387 = vmatpush.msra.mxu0 0.0
  %1388 = vmatpush.msra.mxu0 0.0
  %1389 = vmatpush.msra.mxu0 0.0
  %1390 = vmatpush.msra.mxu0 0.0
  %1391 = vmatpush.msra.mxu0 0.0
  %1392 = vmatpush.msra.mxu0 0.0
  %1393 = vmatpush.msra.mxu0 0.0
  %1394 = vmatpush.msra.mxu0 0.0
  %1395 = vmatpush.msra.mxu0 %v1362
  %1396 = vmatpush.msra.mxu0 %v1361
  %1397 = vmatpush.msra.mxu0 %v1360
  %1398 = vmatpush.msra.mxu0 %v1359
  %1399 = vmatmul.f32.gmra.mxu0 %v1369
  %v1400 = vpop.f32.mrf.mxu0
  %v1401 = vadd.f32 %v1366, %v1400
  %1402 = vmatmul.f32.gmra.mxu0 %v1372
  %v1403 = vpop.f32.mrf.mxu0
  %v1404 = vadd.f32 %v1366, %v1403
  %1405 = vmatmul.f32.gmra.mxu0 %v1375
  %v1406 = vpop.f32.mrf.mxu0
  %v1407 = vadd.f32 %v1366, %v1406
  %1408 = vmatmul.f32.gmra.mxu0 %v1378
  %v1409 = vpop.f32.mrf.mxu0
  %v1410 = vadd.f32 %v1366, %v1409
  %1411 = vmatmul.f32.gmra.mxu0 %v1381
  %v1412 = vpop.f32.mrf.mxu0
  %v1413 = vadd.f32 %v1366, %v1412
  %1414 = vdwg.mxu0
  %1420 = vrot.lane.b32.xlu0 %v1401, 96
  %v1421 = vpop.permute.xlu0 %1420
  %1422 = vrot.lane.b32.xlu0 %v1404, 96
  %v1423 = vpop.permute.xlu0 %1422
  %1424 = vrot.lane.b32.xlu0 %v1407, 96
  %v1425 = vpop.permute.xlu0 %1424
  %1426 = vrot.lane.b32.xlu0 %v1410, 96
  %v1427 = vpop.permute.xlu0 %1426
  %1428 = vrot.lane.b32.xlu0 %v1413, 96
  %v1429 = vpop.permute.xlu0 %1428
  %v1430 = vsel %vm334, %v1401, 0
  %v1432 = vsel %vm334, %v1404, 0
  %v1434 = vsel %vm334, %v1407, 0
  %v1436 = vsel %vm334, %v1410, 0
  %v1438 = vsel %vm334, %v1413, 0
  %v1440 = vsel %vm334, %v1421, 0
  %v1442 = vsel %vm334, %v1423, 0
  %v1444 = vsel %vm334, %v1425, 0
  %v1446 = vsel %vm334, %v1427, 0
  %v1448 = vsel %vm334, %v1429, 0
  %1450 = vmatpush.xpose.msra.mxu0 0.0
  %1451 = vmatpush.xpose.msra.mxu0 0.0
  %1452 = vmatpush.xpose.msra.mxu0 0.0
  %1453 = vmatpush.xpose.msra.mxu0 0.0
  %1454 = vmatpush.xpose.msra.mxu0 0.0
  %1455 = vmatpush.xpose.msra.mxu0 0.0
  %1456 = vmatpush.xpose.msra.mxu0 0.0
  %1457 = vmatpush.xpose.msra.mxu0 0.0
  %1458 = vmatpush.xpose.msra.mxu0 0.0
  %1459 = vmatpush.xpose.msra.mxu0 0.0
  %1460 = vmatpush.xpose.msra.mxu0 0.0
  %1461 = vmatpush.xpose.msra.mxu0 %v1448
  %1462 = vmatpush.xpose.msra.mxu0 %v1446
  %1463 = vmatpush.xpose.msra.mxu0 %v1444
  %1464 = vmatpush.xpose.msra.mxu0 %v1442
  %1465 = vmatpush.xpose.msra.mxu0 %v1440
  %1466 = vmatmul.f32.gmra.mxu0 %v1430
  %v1467 = vpop.f32.mrf.mxu0
  %v1468 = vadd.f32 0.0, %v1467
  %1469 = vmatmul.f32.gmra.mxu0 %v1432
  %v1470 = vpop.f32.mrf.mxu0
  %v1471 = vadd.f32 0.0, %v1470
  %1472 = vmatmul.f32.gmra.mxu0 %v1434
  %v1473 = vpop.f32.mrf.mxu0
  %v1474 = vadd.f32 0.0, %v1473
  %1475 = vmatmul.f32.gmra.mxu0 %v1436
  %v1476 = vpop.f32.mrf.mxu0
  %v1477 = vadd.f32 0.0, %v1476
  %1478 = vmatmul.f32.gmra.mxu0 %v1438
  %v1479 = vpop.f32.mrf.mxu0
  %v1480 = vadd.f32 0.0, %v1479
  %1481 = vdwg.mxu0
  %v1482 = vmul.f32 %v1468, 0.25
  %v1483 = vmul.f32 %v1471, 0.25
  %v1484 = vmul.f32 %v1474, 0.25
  %v1485 = vmul.f32 %v1477, 0.25
  %v1486 = vmul.f32 %v1480, 0.25
  %v1487 = vadd.f32 %v1482, %v123
  %v1488 = vadd.f32 %v1483, %v124
  %v1489 = vadd.f32 %v1484, %v125
  %v1490 = vadd.f32 %v1485, %v126
  %v1491 = vadd.f32 %v1486, %v127
  %v1492 = vsel %vm397, %v1487, -inf
  %1493 = vmax.xlane.f32.xlu0 %v1492
  %v1494 = vpop.xlane.xlu0 %1493
  %v1495 = vsel %vm397, %v1488, -inf
  %1496 = vmax.xlane.f32.xlu0 %v1495
  %v1497 = vpop.xlane.xlu0 %1496
  %v1498 = vsel %vm397, %v1489, -inf
  %1499 = vmax.xlane.f32.xlu0 %v1498
  %v1500 = vpop.xlane.xlu0 %1499
  %v1501 = vsel %vm397, %v1490, -inf
  %1502 = vmax.xlane.f32.xlu0 %v1501
  %v1503 = vpop.xlane.xlu0 %1502
  %v1504 = vsel %vm410, %v1491, -inf
  %1505 = vmax.xlane.f32.xlu0 %v1504
  %v1506 = vpop.xlane.xlu0 %1505
  %v1507 = vsub.f32 %v1487, %v1494
  %v1508 = vsub.f32 %v1488, %v1497
  %v1509 = vsub.f32 %v1489, %v1500
  %v1510 = vsub.f32 %v1490, %v1503
  %v1511 = vsub.f32 %v1491, %v1506
  %v1512 = vmul.f32 %v1507, 1.442695
  %v1513 = vpow.pop %v1512
  %v1514 = vmul.f32 %v1508, 1.442695
  %v1515 = vpow.pop %v1514
  %v1516 = vmul.f32 %v1509, 1.442695
  %v1517 = vpow.pop %v1516
  %v1518 = vmul.f32 %v1510, 1.442695
  %v1519 = vpow.pop %v1518
  %v1520 = vmul.f32 %v1511, 1.442695
  %v1521 = vpow.pop %v1520
  %v1522 = vsel %vm397, %v1513, 0.0
  %1523 = vadd.xlane.f32.xlu0 %v1522
  %v1524 = vpop.xlane.xlu0 %1523
  %v1525 = vsel %vm397, %v1515, 0.0
  %1526 = vadd.xlane.f32.xlu0 %v1525
  %v1527 = vpop.xlane.xlu0 %1526
  %v1528 = vsel %vm397, %v1517, 0.0
  %1529 = vadd.xlane.f32.xlu0 %v1528
  %v1530 = vpop.xlane.xlu0 %1529
  %v1531 = vsel %vm397, %v1519, 0.0
  %1532 = vadd.xlane.f32.xlu0 %v1531
  %v1533 = vpop.xlane.xlu0 %1532
  %v1534 = vsel %vm410, %v1521, 0.0
  %1535 = vadd.xlane.f32.xlu0 %v1534
  %v1536 = vpop.xlane.xlu0 %1535
  %v1537 = vrcp.pop %v1524
  %v1538 = vmul.f32 %v1524, %v1537
  %v1539 = vsub.f32 1.0, %v1538
  %v1540 = vmul.f32 %v1537, %v1539
  %v1541 = vadd.f32 %v1537, %v1540
  %vm1542 = vweird.f32 %v1524
  %vm1543 = vweird.f32 %v1537
  %vm1544 = vmor %vm1542, %vm1543
  %v1545 = vsel %vm1544, %v1537, %v1541
  %v1546 = vand.u32 2147483647, %v1524
  %vm1547 = vcmp.eq.f32.partialorder %v1546, 8.507059e+37
  %v1548 = vand.u32 %v1524, 2147483648
  %v1549 = vor.u32 1.1754944e-38, %v1548
  %v1550 = vsel %vm1547, %v1549, %v1545
  %v1551 = vmul.f32 %v1513, %v1550
  %v1552 = vrcp.pop %v1527
  %v1553 = vmul.f32 %v1527, %v1552
  %v1554 = vsub.f32 1.0, %v1553
  %v1555 = vmul.f32 %v1552, %v1554
  %v1556 = vadd.f32 %v1552, %v1555
  %vm1557 = vweird.f32 %v1527
  %vm1558 = vweird.f32 %v1552
  %vm1559 = vmor %vm1557, %vm1558
  %v1560 = vsel %vm1559, %v1552, %v1556
  %v1561 = vand.u32 2147483647, %v1527
  %vm1562 = vcmp.eq.f32.partialorder %v1561, 8.507059e+37
  %v1563 = vand.u32 %v1527, 2147483648
  %v1564 = vor.u32 1.1754944e-38, %v1563
  %v1565 = vsel %vm1562, %v1564, %v1560
  %v1566 = vmul.f32 %v1515, %v1565
  %v1567 = vrcp.pop %v1530
  %v1568 = vmul.f32 %v1530, %v1567
  %v1569 = vsub.f32 1.0, %v1568
  %v1570 = vmul.f32 %v1567, %v1569
  %v1571 = vadd.f32 %v1567, %v1570
  %vm1572 = vweird.f32 %v1530
  %vm1573 = vweird.f32 %v1567
  %vm1574 = vmor %vm1572, %vm1573
  %v1575 = vsel %vm1574, %v1567, %v1571
  %v1576 = vand.u32 2147483647, %v1530
  %vm1577 = vcmp.eq.f32.partialorder %v1576, 8.507059e+37
  %v1578 = vand.u32 %v1530, 2147483648
  %v1579 = vor.u32 1.1754944e-38, %v1578
  %v1580 = vsel %vm1577, %v1579, %v1575
  %v1581 = vmul.f32 %v1517, %v1580
  %v1582 = vrcp.pop %v1533
  %v1583 = vmul.f32 %v1533, %v1582
  %v1584 = vsub.f32 1.0, %v1583
  %v1585 = vmul.f32 %v1582, %v1584
  %v1586 = vadd.f32 %v1582, %v1585
  %vm1587 = vweird.f32 %v1533
  %vm1588 = vweird.f32 %v1582
  %vm1589 = vmor %vm1587, %vm1588
  %v1590 = vsel %vm1589, %v1582, %v1586
  %v1591 = vand.u32 2147483647, %v1533
  %vm1592 = vcmp.eq.f32.partialorder %v1591, 8.507059e+37
  %v1593 = vand.u32 %v1533, 2147483648
  %v1594 = vor.u32 1.1754944e-38, %v1593
  %v1595 = vsel %vm1592, %v1594, %v1590
  %v1596 = vmul.f32 %v1519, %v1595
  %v1597 = vrcp.pop %v1536
  %v1598 = vmul.f32 %v1536, %v1597
  %v1599 = vsub.f32 1.0, %v1598
  %v1600 = vmul.f32 %v1597, %v1599
  %v1601 = vadd.f32 %v1597, %v1600
  %vm1602 = vweird.f32 %v1536
  %vm1603 = vweird.f32 %v1597
  %vm1604 = vmor %vm1602, %vm1603
  %v1605 = vsel %vm1604, %v1597, %v1601
  %v1606 = vand.u32 2147483647, %v1536
  %vm1607 = vcmp.eq.f32.partialorder %v1606, 8.507059e+37
  %v1608 = vand.u32 %v1536, 2147483648
  %v1609 = vor.u32 1.1754944e-38, %v1608
  %v1610 = vsel %vm1607, %v1609, %v1605
  %v1611 = vmul.f32 %v1521, %v1610
  %1612 = vrot.lane.b32.xlu0 %v1401, 64
  %v1613 = vpop.permute.xlu0 %1612
  %1614 = vrot.lane.b32.xlu0 %v1404, 64
  %v1615 = vpop.permute.xlu0 %1614
  %1616 = vrot.lane.b32.xlu0 %v1407, 64
  %v1617 = vpop.permute.xlu0 %1616
  %1618 = vrot.lane.b32.xlu0 %v1410, 64
  %v1619 = vpop.permute.xlu0 %1618
  %1620 = vrot.lane.b32.xlu0 %v1413, 64
  %v1621 = vpop.permute.xlu0 %1620
  %v1627 = vsel %vm397, %v1551, 0
  %v1630 = vsel %vm397, %v1566, 0
  %v1633 = vsel %vm397, %v1581, 0
  %v1636 = vsel %vm397, %v1596, 0
  %v1639 = vsel %vm397, %v1611, 0
  %v1641 = vsel %vm548, %v1621, 0
  %1643 = vmatpush.msra.mxu0 0.0
  %1644 = vmatpush.msra.mxu0 0.0
  %1645 = vmatpush.msra.mxu0 0.0
  %1646 = vmatpush.msra.mxu0 0.0
  %1647 = vmatpush.msra.mxu0 0.0
  %1648 = vmatpush.msra.mxu0 0.0
  %1649 = vmatpush.msra.mxu0 0.0
  %1650 = vmatpush.msra.mxu0 0.0
  %1651 = vmatpush.msra.mxu0 0.0
  %1652 = vmatpush.msra.mxu0 0.0
  %1653 = vmatpush.msra.mxu0 0.0
  %1654 = vmatpush.msra.mxu0 %v1641
  %1655 = vmatpush.msra.mxu0 %v1619
  %1656 = vmatpush.msra.mxu0 %v1617
  %1657 = vmatpush.msra.mxu0 %v1615
  %1658 = vmatpush.msra.mxu0 %v1613
  %1659 = vmatmul.f32.gmra.mxu0 %v1627
  %v1660 = vpop.f32.mrf.mxu0
  %v1661 = vadd.f32 0.0, %v1660
  %1662 = vmatmul.f32.gmra.mxu0 %v1630
  %v1663 = vpop.f32.mrf.mxu0
  %v1664 = vadd.f32 0.0, %v1663
  %1665 = vmatmul.f32.gmra.mxu0 %v1633
  %v1666 = vpop.f32.mrf.mxu0
  %v1667 = vadd.f32 0.0, %v1666
  %1668 = vmatmul.f32.gmra.mxu0 %v1636
  %v1669 = vpop.f32.mrf.mxu0
  %v1670 = vadd.f32 0.0, %v1669
  %1671 = vmatmul.f32.gmra.mxu0 %v1639
  %v1672 = vpop.f32.mrf.mxu0
  %v1673 = vadd.f32 0.0, %v1672
  %1674 = vdwg.mxu0
  %1675 = vrot.lane.b32.xlu0 %v1401, 112
  %v1676 = vpop.permute.xlu0 %1675
  %1677 = vrot.lane.b32.xlu0 %v1404, 112
  %v1678 = vpop.permute.xlu0 %1677
  %1679 = vrot.lane.b32.xlu0 %v1407, 112
  %v1680 = vpop.permute.xlu0 %1679
  %1681 = vrot.lane.b32.xlu0 %v1410, 112
  %v1682 = vpop.permute.xlu0 %1681
  %1683 = vrot.lane.b32.xlu0 %v1413, 112
  %v1684 = vpop.permute.xlu0 %1683
  %1685 = vrot.lane.b32.xlu0 %v1401, 80
  %v1686 = vpop.permute.xlu0 %1685
  %1687 = vrot.lane.b32.xlu0 %v1404, 80
  %v1688 = vpop.permute.xlu0 %1687
  %1689 = vrot.lane.b32.xlu0 %v1407, 80
  %v1690 = vpop.permute.xlu0 %1689
  %1691 = vrot.lane.b32.xlu0 %v1410, 80
  %v1692 = vpop.permute.xlu0 %1691
  %1693 = vrot.lane.b32.xlu0 %v1413, 80
  %v1694 = vpop.permute.xlu0 %1693
  %v1695 = vsel %vm334, %v1676, 0
  %v1697 = vsel %vm334, %v1678, 0
  %v1699 = vsel %vm334, %v1680, 0
  %v1701 = vsel %vm334, %v1682, 0
  %v1703 = vsel %vm334, %v1684, 0
  %v1705 = vsel %vm334, %v1686, 0
  %v1707 = vsel %vm334, %v1688, 0
  %v1709 = vsel %vm334, %v1690, 0
  %v1711 = vsel %vm334, %v1692, 0
  %v1713 = vsel %vm334, %v1694, 0
  %1715 = vmatpush.xpose.msra.mxu0 0.0
  %1716 = vmatpush.xpose.msra.mxu0 0.0
  %1717 = vmatpush.xpose.msra.mxu0 0.0
  %1718 = vmatpush.xpose.msra.mxu0 0.0
  %1719 = vmatpush.xpose.msra.mxu0 0.0
  %1720 = vmatpush.xpose.msra.mxu0 0.0
  %1721 = vmatpush.xpose.msra.mxu0 0.0
  %1722 = vmatpush.xpose.msra.mxu0 0.0
  %1723 = vmatpush.xpose.msra.mxu0 0.0
  %1724 = vmatpush.xpose.msra.mxu0 0.0
  %1725 = vmatpush.xpose.msra.mxu0 0.0
  %1726 = vmatpush.xpose.msra.mxu0 %v1713
  %1727 = vmatpush.xpose.msra.mxu0 %v1711
  %1728 = vmatpush.xpose.msra.mxu0 %v1709
  %1729 = vmatpush.xpose.msra.mxu0 %v1707
  %1730 = vmatpush.xpose.msra.mxu0 %v1705
  %1731 = vmatmul.f32.gmra.mxu0 %v1695
  %v1732 = vpop.f32.mrf.mxu0
  %v1733 = vadd.f32 0.0, %v1732
  %1734 = vmatmul.f32.gmra.mxu0 %v1697
  %v1735 = vpop.f32.mrf.mxu0
  %v1736 = vadd.f32 0.0, %v1735
  %1737 = vmatmul.f32.gmra.mxu0 %v1699
  %v1738 = vpop.f32.mrf.mxu0
  %v1739 = vadd.f32 0.0, %v1738
  %1740 = vmatmul.f32.gmra.mxu0 %v1701
  %v1741 = vpop.f32.mrf.mxu0
  %v1742 = vadd.f32 0.0, %v1741
  %1743 = vmatmul.f32.gmra.mxu0 %v1703
  %v1744 = vpop.f32.mrf.mxu0
  %v1745 = vadd.f32 0.0, %v1744
  %1746 = vdwg.mxu0
  %v1747 = vmul.f32 %v1733, 0.25
  %v1748 = vmul.f32 %v1736, 0.25
  %v1749 = vmul.f32 %v1739, 0.25
  %v1750 = vmul.f32 %v1742, 0.25
  %v1751 = vmul.f32 %v1745, 0.25
  %v1752 = vadd.f32 %v1747, %v123
  %v1753 = vadd.f32 %v1748, %v124
  %v1754 = vadd.f32 %v1749, %v125
  %v1755 = vadd.f32 %v1750, %v126
  %v1756 = vadd.f32 %v1751, %v127
  %v1757 = vsel %vm397, %v1752, -inf
  %1758 = vmax.xlane.f32.xlu0 %v1757
  %v1759 = vpop.xlane.xlu0 %1758
  %v1760 = vsel %vm397, %v1753, -inf
  %1761 = vmax.xlane.f32.xlu0 %v1760
  %v1762 = vpop.xlane.xlu0 %1761
  %v1763 = vsel %vm397, %v1754, -inf
  %1764 = vmax.xlane.f32.xlu0 %v1763
  %v1765 = vpop.xlane.xlu0 %1764
  %v1766 = vsel %vm397, %v1755, -inf
  %1767 = vmax.xlane.f32.xlu0 %v1766
  %v1768 = vpop.xlane.xlu0 %1767
  %v1769 = vsel %vm410, %v1756, -inf
  %1770 = vmax.xlane.f32.xlu0 %v1769
  %v1771 = vpop.xlane.xlu0 %1770
  %v1772 = vsub.f32 %v1752, %v1759
  %v1773 = vsub.f32 %v1753, %v1762
  %v1774 = vsub.f32 %v1754, %v1765
  %v1775 = vsub.f32 %v1755, %v1768
  %v1776 = vsub.f32 %v1756, %v1771
  %v1777 = vmul.f32 %v1772, 1.442695
  %v1778 = vpow.pop %v1777
  %v1779 = vmul.f32 %v1773, 1.442695
  %v1780 = vpow.pop %v1779
  %v1781 = vmul.f32 %v1774, 1.442695
  %v1782 = vpow.pop %v1781
  %v1783 = vmul.f32 %v1775, 1.442695
  %v1784 = vpow.pop %v1783
  %v1785 = vmul.f32 %v1776, 1.442695
  %v1786 = vpow.pop %v1785
  %v1787 = vsel %vm397, %v1778, 0.0
  %1788 = vadd.xlane.f32.xlu0 %v1787
  %v1789 = vpop.xlane.xlu0 %1788
  %v1790 = vsel %vm397, %v1780, 0.0
  %1791 = vadd.xlane.f32.xlu0 %v1790
  %v1792 = vpop.xlane.xlu0 %1791
  %v1793 = vsel %vm397, %v1782, 0.0
  %1794 = vadd.xlane.f32.xlu0 %v1793
  %v1795 = vpop.xlane.xlu0 %1794
  %v1796 = vsel %vm397, %v1784, 0.0
  %1797 = vadd.xlane.f32.xlu0 %v1796
  %v1798 = vpop.xlane.xlu0 %1797
  %v1799 = vsel %vm410, %v1786, 0.0
  %1800 = vadd.xlane.f32.xlu0 %v1799
  %v1801 = vpop.xlane.xlu0 %1800
  %v1802 = vrcp.pop %v1789
  %v1803 = vmul.f32 %v1789, %v1802
  %v1804 = vsub.f32 1.0, %v1803
  %v1805 = vmul.f32 %v1802, %v1804
  %v1806 = vadd.f32 %v1802, %v1805
  %vm1807 = vweird.f32 %v1789
  %vm1808 = vweird.f32 %v1802
  %vm1809 = vmor %vm1807, %vm1808
  %v1810 = vsel %vm1809, %v1802, %v1806
  %v1811 = vand.u32 2147483647, %v1789
  %vm1812 = vcmp.eq.f32.partialorder %v1811, 8.507059e+37
  %v1813 = vand.u32 %v1789, 2147483648
  %v1814 = vor.u32 1.1754944e-38, %v1813
  %v1815 = vsel %vm1812, %v1814, %v1810
  %v1816 = vmul.f32 %v1778, %v1815
  %v1817 = vrcp.pop %v1792
  %v1818 = vmul.f32 %v1792, %v1817
  %v1819 = vsub.f32 1.0, %v1818
  %v1820 = vmul.f32 %v1817, %v1819
  %v1821 = vadd.f32 %v1817, %v1820
  %vm1822 = vweird.f32 %v1792
  %vm1823 = vweird.f32 %v1817
  %vm1824 = vmor %vm1822, %vm1823
  %v1825 = vsel %vm1824, %v1817, %v1821
  %v1826 = vand.u32 2147483647, %v1792
  %vm1827 = vcmp.eq.f32.partialorder %v1826, 8.507059e+37
  %v1828 = vand.u32 %v1792, 2147483648
  %v1829 = vor.u32 1.1754944e-38, %v1828
  %v1830 = vsel %vm1827, %v1829, %v1825
  %v1831 = vmul.f32 %v1780, %v1830
  %v1832 = vrcp.pop %v1795
  %v1833 = vmul.f32 %v1795, %v1832
  %v1834 = vsub.f32 1.0, %v1833
  %v1835 = vmul.f32 %v1832, %v1834
  %v1836 = vadd.f32 %v1832, %v1835
  %vm1837 = vweird.f32 %v1795
  %vm1838 = vweird.f32 %v1832
  %vm1839 = vmor %vm1837, %vm1838
  %v1840 = vsel %vm1839, %v1832, %v1836
  %v1841 = vand.u32 2147483647, %v1795
  %vm1842 = vcmp.eq.f32.partialorder %v1841, 8.507059e+37
  %v1843 = vand.u32 %v1795, 2147483648
  %v1844 = vor.u32 1.1754944e-38, %v1843
  %v1845 = vsel %vm1842, %v1844, %v1840
  %v1846 = vmul.f32 %v1782, %v1845
  %v1847 = vrcp.pop %v1798
  %v1848 = vmul.f32 %v1798, %v1847
  %v1849 = vsub.f32 1.0, %v1848
  %v1850 = vmul.f32 %v1847, %v1849
  %v1851 = vadd.f32 %v1847, %v1850
  %vm1852 = vweird.f32 %v1798
  %vm1853 = vweird.f32 %v1847
  %vm1854 = vmor %vm1852, %vm1853
  %v1855 = vsel %vm1854, %v1847, %v1851
  %v1856 = vand.u32 2147483647, %v1798
  %vm1857 = vcmp.eq.f32.partialorder %v1856, 8.507059e+37
  %v1858 = vand.u32 %v1798, 2147483648
  %v1859 = vor.u32 1.1754944e-38, %v1858
  %v1860 = vsel %vm1857, %v1859, %v1855
  %v1861 = vmul.f32 %v1784, %v1860
  %v1862 = vrcp.pop %v1801
  %v1863 = vmul.f32 %v1801, %v1862
  %v1864 = vsub.f32 1.0, %v1863
  %v1865 = vmul.f32 %v1862, %v1864
  %v1866 = vadd.f32 %v1862, %v1865
  %vm1867 = vweird.f32 %v1801
  %vm1868 = vweird.f32 %v1862
  %vm1869 = vmor %vm1867, %vm1868
  %v1870 = vsel %vm1869, %v1862, %v1866
  %v1871 = vand.u32 2147483647, %v1801
  %vm1872 = vcmp.eq.f32.partialorder %v1871, 8.507059e+37
  %v1873 = vand.u32 %v1801, 2147483648
  %v1874 = vor.u32 1.1754944e-38, %v1873
  %v1875 = vsel %vm1872, %v1874, %v1870
  %v1876 = vmul.f32 %v1786, %v1875
  %1877 = vrot.lane.b32.xlu0 %v1401, 48
  %v1878 = vpop.permute.xlu0 %1877
  %1879 = vrot.lane.b32.xlu0 %v1404, 48
  %v1880 = vpop.permute.xlu0 %1879
  %1881 = vrot.lane.b32.xlu0 %v1407, 48
  %v1882 = vpop.permute.xlu0 %1881
  %1883 = vrot.lane.b32.xlu0 %v1410, 48
  %v1884 = vpop.permute.xlu0 %1883
  %1885 = vrot.lane.b32.xlu0 %v1413, 48
  %v1886 = vpop.permute.xlu0 %1885
  %v1892 = vsel %vm397, %v1816, 0
  %v1895 = vsel %vm397, %v1831, 0
  %v1898 = vsel %vm397, %v1846, 0
  %v1901 = vsel %vm397, %v1861, 0
  %v1904 = vsel %vm397, %v1876, 0
  %v1906 = vsel %vm548, %v1886, 0
  %1908 = vmatpush.msra.mxu0 0.0
  %1909 = vmatpush.msra.mxu0 0.0
  %1910 = vmatpush.msra.mxu0 0.0
  %1911 = vmatpush.msra.mxu0 0.0
  %1912 = vmatpush.msra.mxu0 0.0
  %1913 = vmatpush.msra.mxu0 0.0
  %1914 = vmatpush.msra.mxu0 0.0
  %1915 = vmatpush.msra.mxu0 0.0
  %1916 = vmatpush.msra.mxu0 0.0
  %1917 = vmatpush.msra.mxu0 0.0
  %1918 = vmatpush.msra.mxu0 0.0
  %1919 = vmatpush.msra.mxu0 %v1906
  %1920 = vmatpush.msra.mxu0 %v1884
  %1921 = vmatpush.msra.mxu0 %v1882
  %1922 = vmatpush.msra.mxu0 %v1880
  %1923 = vmatpush.msra.mxu0 %v1878
  %1924 = vmatmul.f32.gmra.mxu0 %v1892
  %v1925 = vpop.f32.mrf.mxu0
  %v1926 = vadd.f32 0.0, %v1925
  %1927 = vmatmul.f32.gmra.mxu0 %v1895
  %v1928 = vpop.f32.mrf.mxu0
  %v1929 = vadd.f32 0.0, %v1928
  %1930 = vmatmul.f32.gmra.mxu0 %v1898
  %v1931 = vpop.f32.mrf.mxu0
  %v1932 = vadd.f32 0.0, %v1931
  %1933 = vmatmul.f32.gmra.mxu0 %v1901
  %v1934 = vpop.f32.mrf.mxu0
  %v1935 = vadd.f32 0.0, %v1934
  %1936 = vmatmul.f32.gmra.mxu0 %v1904
  %v1937 = vpop.f32.mrf.mxu0
  %v1938 = vadd.f32 0.0, %v1937
  %1939 = vdwg.mxu0
  %v1941 = vsel %vm334, %v1926, 0
  %v1944 = vsel %vm334, %v1929, 0
  %v1947 = vsel %vm334, %v1932, 0
  %v1950 = vsel %vm334, %v1935, 0
  %v1953 = vsel %vm334, %v1938, 0
  %1955 = vmatpush.msra.mxu0 0.0
  %1956 = vmatpush.msra.mxu0 0.0
  %1957 = vmatpush.msra.mxu0 0.0
  %1958 = vmatpush.msra.mxu0 0.0
  %1959 = vmatpush.msra.mxu0 0.0
  %1960 = vmatpush.msra.mxu0 0.0
  %1961 = vmatpush.msra.mxu0 0.0
  %1962 = vmatpush.msra.mxu0 0.0
  %1963 = vmatpush.msra.mxu0 0.0
  %1964 = vmatpush.msra.mxu0 0.0
  %1965 = vmatpush.msra.mxu0 0.0
  %1966 = vmatpush.msra.mxu0 0.0
  %1967 = vmatpush.msra.mxu0 0.0
  %1968 = vmatpush.msra.mxu0 0.0
  %1969 = vmatpush.msra.mxu0 %v1235
  %1970 = vmatpush.msra.mxu0 %v1234
  %1971 = vmatmul.f32.gmra.mxu0 %v1941
  %v1972 = vpop.f32.mrf.mxu0
  %v1973 = vadd.f32 0.0, %v1972
  %1974 = vmatmul.f32.gmra.mxu0 %v1944
  %v1975 = vpop.f32.mrf.mxu0
  %v1976 = vadd.f32 0.0, %v1975
  %1977 = vmatmul.f32.gmra.mxu0 %v1947
  %v1978 = vpop.f32.mrf.mxu0
  %v1979 = vadd.f32 0.0, %v1978
  %1980 = vmatmul.f32.gmra.mxu0 %v1950
  %v1981 = vpop.f32.mrf.mxu0
  %v1982 = vadd.f32 0.0, %v1981
  %1983 = vmatmul.f32.gmra.mxu0 %v1953
  %v1984 = vpop.f32.mrf.mxu0
  %v1985 = vadd.f32 0.0, %v1984
  %1986 = vdwg.mxu0
  %v1988 = vsel %vm334, %v1661, 0
  %v1991 = vsel %vm334, %v1664, 0
  %v1994 = vsel %vm334, %v1667, 0
  %v1997 = vsel %vm334, %v1670, 0
  %v2000 = vsel %vm334, %v1673, 0
  %2002 = vmatpush.msra.mxu0 0.0
  %2003 = vmatpush.msra.mxu0 0.0
  %2004 = vmatpush.msra.mxu0 0.0
  %2005 = vmatpush.msra.mxu0 0.0
  %2006 = vmatpush.msra.mxu0 0.0
  %2007 = vmatpush.msra.mxu0 0.0
  %2008 = vmatpush.msra.mxu0 0.0
  %2009 = vmatpush.msra.mxu0 0.0
  %2010 = vmatpush.msra.mxu0 0.0
  %2011 = vmatpush.msra.mxu0 0.0
  %2012 = vmatpush.msra.mxu0 0.0
  %2013 = vmatpush.msra.mxu0 0.0
  %2014 = vmatpush.msra.mxu0 0.0
  %2015 = vmatpush.msra.mxu0 0.0
  %2016 = vmatpush.msra.mxu0 %v1233
  %2017 = vmatpush.msra.mxu0 %v1232
  %2018 = vmatmul.f32.gmra.mxu0 %v1988
  %v2019 = vpop.f32.mrf.mxu0
  %v2020 = vadd.f32 %v1973, %v2019
  %2021 = vmatmul.f32.gmra.mxu0 %v1991
  %v2022 = vpop.f32.mrf.mxu0
  %v2023 = vadd.f32 %v1976, %v2022
  %2024 = vmatmul.f32.gmra.mxu0 %v1994
  %v2025 = vpop.f32.mrf.mxu0
  %v2026 = vadd.f32 %v1979, %v2025
  %2027 = vmatmul.f32.gmra.mxu0 %v1997
  %v2028 = vpop.f32.mrf.mxu0
  %v2029 = vadd.f32 %v1982, %v2028
  %2030 = vmatmul.f32.gmra.mxu0 %v2000
  %v2031 = vpop.f32.mrf.mxu0
  %v2032 = vadd.f32 %v1985, %v2031
  %2033 = vdwg.mxu0
  %v2034 = vadd.f32 %v1224, %v2020
  %v2035 = vadd.f32 %v1225, %v2023
  %v2036 = vadd.f32 %v1226, %v2026
  %v2037 = vadd.f32 %v1227, %v2029
  %v2038 = vadd.f32 %v1228, %v2032
  %v2039 = vperm.slane %v1230, 4
  %v2040 = vadd.f32 %v2034, %v2039
  %v2041 = vadd.f32 %v2035, %v2039
  %v2042 = vadd.f32 %v2036, %v2039
  %v2043 = vadd.f32 %v2037, %v2039
  %v2044 = vadd.f32 %v2038, %v2039
  %v2045 = vsel %vm133, %v2040, 0.0
  %2046 = vadd.xlane.f32.xlu0 %v2045
  %v2047 = vpop.xlane.xlu0 %2046
  %v2048 = vsel %vm133, %v2041, 0.0
  %2049 = vadd.xlane.f32.xlu0 %v2048
  %v2050 = vpop.xlane.xlu0 %2049
  %v2051 = vsel %vm133, %v2042, 0.0
  %2052 = vadd.xlane.f32.xlu0 %v2051
  %v2053 = vpop.xlane.xlu0 %2052
  %v2054 = vsel %vm133, %v2043, 0.0
  %2055 = vadd.xlane.f32.xlu0 %v2054
  %v2056 = vpop.xlane.xlu0 %2055
  %v2057 = vsel %vm146, %v2044, 0.0
  %2058 = vadd.xlane.f32.xlu0 %v2057
  %v2059 = vpop.xlane.xlu0 %2058
  %v2060 = vmul.f32 %v2047, %v156
  %v2061 = vmul.f32 %v2050, %v156
  %v2062 = vmul.f32 %v2053, %v156
  %v2063 = vmul.f32 %v2056, %v156
  %v2064 = vmul.f32 %v2059, %v156
  %v2065 = vsub.f32 %v2040, %v2060
  %v2066 = vsub.f32 %v2041, %v2061
  %v2067 = vsub.f32 %v2042, %v2062
  %v2068 = vsub.f32 %v2043, %v2063
  %v2069 = vsub.f32 %v2044, %v2064
  %v2070 = vmul.f32 %v2065, %v2065
  %v2071 = vmul.f32 %v2066, %v2066
  %v2072 = vmul.f32 %v2067, %v2067
  %v2073 = vmul.f32 %v2068, %v2068
  %v2074 = vmul.f32 %v2069, %v2069
  %v2075 = vsel %vm133, %v2070, 0.0
  %2076 = vadd.xlane.f32.xlu0 %v2075
  %v2077 = vpop.xlane.xlu0 %2076
  %v2078 = vsel %vm133, %v2071, 0.0
  %2079 = vadd.xlane.f32.xlu0 %v2078
  %v2080 = vpop.xlane.xlu0 %2079
  %v2081 = vsel %vm133, %v2072, 0.0
  %2082 = vadd.xlane.f32.xlu0 %v2081
  %v2083 = vpop.xlane.xlu0 %2082
  %v2084 = vsel %vm133, %v2073, 0.0
  %2085 = vadd.xlane.f32.xlu0 %v2084
  %v2086 = vpop.xlane.xlu0 %2085
  %v2087 = vsel %vm146, %v2074, 0.0
  %2088 = vadd.xlane.f32.xlu0 %v2087
  %v2089 = vpop.xlane.xlu0 %2088
  %v2090 = vmul.f32 %v2077, %v156
  %v2091 = vmul.f32 %v2080, %v156
  %v2092 = vmul.f32 %v2083, %v156
  %v2093 = vmul.f32 %v2086, %v156
  %v2094 = vmul.f32 %v2089, %v156
  %v2095 = vadd.f32 %v2090, 1e-12
  %v2096 = vadd.f32 %v2091, 1e-12
  %v2097 = vadd.f32 %v2092, 1e-12
  %v2098 = vadd.f32 %v2093, 1e-12
  %v2099 = vadd.f32 %v2094, 1e-12
  %v2100 = vrsqrt.pop %v2095
  %v2101 = vmul.f32 %v2100, %v2095
  %v2102 = vmul.f32 %v2101, %v2100
  %v2103 = vmul.f32 0.5, %v2102
  %v2104 = vsub.f32 1.5, %v2103
  %v2105 = vmul.f32 %v2100, %v2104
  %vm2106 = vweird.f32 %v2095
  %vm2107 = vweird.f32 %v2100
  %vm2108 = vmor %vm2106, %vm2107
  %v2109 = vsel %vm2108, %v2100, %v2105
  %v2110 = vrsqrt.pop %v2096
  %v2111 = vmul.f32 %v2110, %v2096
  %v2112 = vmul.f32 %v2111, %v2110
  %v2113 = vmul.f32 0.5, %v2112
  %v2114 = vsub.f32 1.5, %v2113
  %v2115 = vmul.f32 %v2110, %v2114
  %vm2116 = vweird.f32 %v2096
  %vm2117 = vweird.f32 %v2110
  %vm2118 = vmor %vm2116, %vm2117
  %v2119 = vsel %vm2118, %v2110, %v2115
  %v2120 = vrsqrt.pop %v2097
  %v2121 = vmul.f32 %v2120, %v2097
  %v2122 = vmul.f32 %v2121, %v2120
  %v2123 = vmul.f32 0.5, %v2122
  %v2124 = vsub.f32 1.5, %v2123
  %v2125 = vmul.f32 %v2120, %v2124
  %vm2126 = vweird.f32 %v2097
  %vm2127 = vweird.f32 %v2120
  %vm2128 = vmor %vm2126, %vm2127
  %v2129 = vsel %vm2128, %v2120, %v2125
  %v2130 = vrsqrt.pop %v2098
  %v2131 = vmul.f32 %v2130, %v2098
  %v2132 = vmul.f32 %v2131, %v2130
  %v2133 = vmul.f32 0.5, %v2132
  %v2134 = vsub.f32 1.5, %v2133
  %v2135 = vmul.f32 %v2130, %v2134
  %vm2136 = vweird.f32 %v2098
  %vm2137 = vweird.f32 %v2130
  %vm2138 = vmor %vm2136, %vm2137
  %v2139 = vsel %vm2138, %v2130, %v2135
  %v2140 = vrsqrt.pop %v2099
  %v2141 = vmul.f32 %v2140, %v2099
  %v2142 = vmul.f32 %v2141, %v2140
  %v2143 = vmul.f32 0.5, %v2142
  %v2144 = vsub.f32 1.5, %v2143
  %v2145 = vmul.f32 %v2140, %v2144
  %vm2146 = vweird.f32 %v2099
  %vm2147 = vweird.f32 %v2140
  %vm2148 = vmor %vm2146, %vm2147
  %v2149 = vsel %vm2148, %v2140, %v2145
  %v2150 = vmul.f32 %v2065, %v2109
  %v2151 = vmul.f32 %v2066, %v2119
  %v2152 = vmul.f32 %v2067, %v2129
  %v2153 = vmul.f32 %v2068, %v2139
  %v2154 = vmul.f32 %v2069, %v2149
  %v2155 = vperm.slane %v1230, 2
  %v2156 = vmul.f32 %v2150, %v2155
  %v2157 = vmul.f32 %v2151, %v2155
  %v2158 = vmul.f32 %v2152, %v2155
  %v2159 = vmul.f32 %v2153, %v2155
  %v2160 = vmul.f32 %v2154, %v2155
  %v2161 = vperm.slane %v1230, 3
  %v2162 = vadd.f32 %v2156, %v2161
  %v2163 = vadd.f32 %v2157, %v2161
  %v2164 = vadd.f32 %v2158, %v2161
  %v2165 = vadd.f32 %v2159, %v2161
  %v2166 = vadd.f32 %v2160, %v2161
  %s2167 = scalar_lea.vmem %s9, 32
  %v2168 = vld [vmem:[%s2167] sm:$0xff]
  %v2169 = vld [vmem:[%s2167 + $0x8] sm:$0xff]
  %v2170 = vld [vmem:[%s2167 + $0x10] sm:$0xff]
  %v2171 = vld [vmem:[%s2167 + $0x18] sm:$0xff]
  %s2172 = scalar_lea.vmem %s10, 1
  %v2173 = vld [vmem:[%s2172] sm:$0x1]
  %v2175 = vperm.slane %v2173, 0
  %v2178 = vsel %vm133, %v2162, 0
  %v2181 = vsel %vm133, %v2163, 0
  %v2184 = vsel %vm133, %v2164, 0
  %v2187 = vsel %vm133, %v2165, 0
  %v2190 = vsel %vm133, %v2166, 0
  %2192 = vmatpush.msra.mxu0 0.0
  %2193 = vmatpush.msra.mxu0 0.0
  %2194 = vmatpush.msra.mxu0 0.0
  %2195 = vmatpush.msra.mxu0 0.0
  %2196 = vmatpush.msra.mxu0 0.0
  %2197 = vmatpush.msra.mxu0 0.0
  %2198 = vmatpush.msra.mxu0 0.0
  %2199 = vmatpush.msra.mxu0 0.0
  %2200 = vmatpush.msra.mxu0 0.0
  %2201 = vmatpush.msra.mxu0 0.0
  %2202 = vmatpush.msra.mxu0 0.0
  %2203 = vmatpush.msra.mxu0 0.0
  %2204 = vmatpush.msra.mxu0 %v2171
  %2205 = vmatpush.msra.mxu0 %v2170
  %2206 = vmatpush.msra.mxu0 %v2169
  %2207 = vmatpush.msra.mxu0 %v2168
  %2208 = vmatmul.f32.gmra.mxu0 %v2178
  %v2209 = vpop.f32.mrf.mxu0
  %v2210 = vadd.f32 %v2175, %v2209
  %2211 = vmatmul.f32.gmra.mxu0 %v2181
  %v2212 = vpop.f32.mrf.mxu0
  %v2213 = vadd.f32 %v2175, %v2212
  %2214 = vmatmul.f32.gmra.mxu0 %v2184
  %v2215 = vpop.f32.mrf.mxu0
  %v2216 = vadd.f32 %v2175, %v2215
  %2217 = vmatmul.f32.gmra.mxu0 %v2187
  %v2218 = vpop.f32.mrf.mxu0
  %v2219 = vadd.f32 %v2175, %v2218
  %2220 = vmatmul.f32.gmra.mxu0 %v2190
  %v2221 = vpop.f32.mrf.mxu0
  %v2222 = vadd.f32 %v2175, %v2221
  %2223 = vdwg.mxu0
  %v2224 = vmul.f32 %v2210, %v2210
  %v2225 = vmul.f32 %v2213, %v2213
  %v2226 = vmul.f32 %v2216, %v2216
  %v2227 = vmul.f32 %v2219, %v2219
  %v2228 = vmul.f32 %v2222, %v2222
  %v2229 = vmul.f32 %v2210, %v2224
  %v2230 = vmul.f32 %v2213, %v2225
  %v2231 = vmul.f32 %v2216, %v2226
  %v2232 = vmul.f32 %v2219, %v2227
  %v2233 = vmul.f32 %v2222, %v2228
  %v2234 = vmul.f32 %v2229, 0.044715
  %v2235 = vmul.f32 %v2230, 0.044715
  %v2236 = vmul.f32 %v2231, 0.044715
  %v2237 = vmul.f32 %v2232, 0.044715
  %v2238 = vmul.f32 %v2233, 0.044715
  %v2239 = vadd.f32 %v2210, %v2234
  %v2240 = vadd.f32 %v2213, %v2235
  %v2241 = vadd.f32 %v2216, %v2236
  %v2242 = vadd.f32 %v2219, %v2237
  %v2243 = vadd.f32 %v2222, %v2238
  %v2244 = vmul.f32 %v2239, 0.7978846
  %v2245 = vmul.f32 %v2240, 0.7978846
  %v2246 = vmul.f32 %v2241, 0.7978846
  %v2247 = vmul.f32 %v2242, 0.7978846
  %v2248 = vmul.f32 %v2243, 0.7978846
  %v2249 = vtanh.pop %v2244
  %v2250 = vtanh.pop %v2245
  %v2251 = vtanh.pop %v2246
  %v2252 = vtanh.pop %v2247
  %v2253 = vtanh.pop %v2248
  %v2254 = vadd.f32 %v2249, 1.0
  %v2255 = vadd.f32 %v2250, 1.0
  %v2256 = vadd.f32 %v2251, 1.0
  %v2257 = vadd.f32 %v2252, 1.0
  %v2258 = vadd.f32 %v2253, 1.0
  %v2259 = vmul.f32 %v2254, 0.5
  %v2260 = vmul.f32 %v2255, 0.5
  %v2261 = vmul.f32 %v2256, 0.5
  %v2262 = vmul.f32 %v2257, 0.5
  %v2263 = vmul.f32 %v2258, 0.5
  %v2264 = vmul.f32 %v2210, %v2259
  %v2265 = vmul.f32 %v2213, %v2260
  %v2266 = vmul.f32 %v2216, %v2261
  %v2267 = vmul.f32 %v2219, %v2262
  %v2268 = vmul.f32 %v2222, %v2263
  %s2269 = scalar_lea.vmem %s11, 128
  %v2270 = vld [vmem:[%s2269] sm:$0xff]
  %v2271 = vld [vmem:[%s2269 + $0x8] sm:$0xff]
  %v2272 = vld [vmem:[%s2269 + $0x10] sm:$0xff]
  %v2273 = vld [vmem:[%s2269 + $0x18] sm:$0xff]
  %v2274 = vld [vmem:[%s2269 + $0x20] sm:$0xff]
  %v2275 = vld [vmem:[%s2269 + $0x28] sm:$0xff]
  %v2276 = vld [vmem:[%s2269 + $0x30] sm:$0xff]
  %v2277 = vld [vmem:[%s2269 + $0x38] sm:$0xff]
  %v2278 = vld [vmem:[%s2269 + $0x40] sm:$0xff]
  %v2279 = vld [vmem:[%s2269 + $0x48] sm:$0xff]
  %v2280 = vld [vmem:[%s2269 + $0x50] sm:$0xff]
  %v2281 = vld [vmem:[%s2269 + $0x58] sm:$0xff]
  %v2282 = vld [vmem:[%s2269 + $0x60] sm:$0xff]
  %v2283 = vld [vmem:[%s2269 + $0x68] sm:$0xff]
  %v2284 = vld [vmem:[%s2269 + $0x70] sm:$0xff]
  %v2285 = vld [vmem:[%s2269 + $0x78] sm:$0xff]
  %v2286 = vperm.slane %v1230, 5
  %2287 = vmatpush.msra.mxu0 %v2285
  %2288 = vmatpush.msra.mxu0 %v2284
  %2289 = vmatpush.msra.mxu0 %v2283
  %2290 = vmatpush.msra.mxu0 %v2282
  %2291 = vmatpush.msra.mxu0 %v2281
  %2292 = vmatpush.msra.mxu0 %v2280
  %2293 = vmatpush.msra.mxu0 %v2279
  %2294 = vmatpush.msra.mxu0 %v2278
  %2295 = vmatpush.msra.mxu0 %v2277
  %2296 = vmatpush.msra.mxu0 %v2276
  %2297 = vmatpush.msra.mxu0 %v2275
  %2298 = vmatpush.msra.mxu0 %v2274
  %2299 = vmatpush.msra.mxu0 %v2273
  %2300 = vmatpush.msra.mxu0 %v2272
  %2301 = vmatpush.msra.mxu0 %v2271
  %2302 = vmatpush.msra.mxu0 %v2270
  %2303 = vmatmul.f32.gmra.mxu0 %v2264
  %v2304 = vpop.f32.mrf.mxu0
  %v2305 = vadd.f32 %v2286, %v2304
  %2306 = vmatmul.f32.gmra.mxu0 %v2265
  %v2307 = vpop.f32.mrf.mxu0
  %v2308 = vadd.f32 %v2286, %v2307
  %2309 = vmatmul.f32.gmra.mxu0 %v2266
  %v2310 = vpop.f32.mrf.mxu0
  %v2311 = vadd.f32 %v2286, %v2310
  %2312 = vmatmul.f32.gmra.mxu0 %v2267
  %v2313 = vpop.f32.mrf.mxu0
  %v2314 = vadd.f32 %v2286, %v2313
  %2315 = vmatmul.f32.gmra.mxu0 %v2268
  %v2316 = vpop.f32.mrf.mxu0
  %v2317 = vadd.f32 %v2286, %v2316
  %2318 = vdwg.mxu0
  %v2319 = vadd.f32 %v2040, %v2305
  %v2320 = vadd.f32 %v2041, %v2308
  %v2321 = vadd.f32 %v2042, %v2311
  %v2322 = vadd.f32 %v2043, %v2314
  %v2323 = vadd.f32 %v2044, %v2317
  %v2324 = vld [vmem:[%s12] sm:$0x3]
  %v2325 = vsel %vm133, %v2319, 0.0
  %2326 = vadd.xlane.f32.xlu0 %v2325
  %v2327 = vpop.xlane.xlu0 %2326
  %v2328 = vsel %vm133, %v2320, 0.0
  %2329 = vadd.xlane.f32.xlu0 %v2328
  %v2330 = vpop.xlane.xlu0 %2329
  %v2331 = vsel %vm133, %v2321, 0.0
  %2332 = vadd.xlane.f32.xlu0 %v2331
  %v2333 = vpop.xlane.xlu0 %2332
  %v2334 = vsel %vm133, %v2322, 0.0
  %2335 = vadd.xlane.f32.xlu0 %v2334
  %v2336 = vpop.xlane.xlu0 %2335
  %v2337 = vsel %vm146, %v2323, 0.0
  %2338 = vadd.xlane.f32.xlu0 %v2337
  %v2339 = vpop.xlane.xlu0 %2338
  %v2340 = vmul.f32 %v2327, %v156
  %v2341 = vmul.f32 %v2330, %v156
  %v2342 = vmul.f32 %v2333, %v156
  %v2343 = vmul.f32 %v2336, %v156
  %v2344 = vmul.f32 %v2339, %v156
  %v2345 = vsub.f32 %v2319, %v2340
  %v2346 = vsub.f32 %v2320, %v2341
  %v2347 = vsub.f32 %v2321, %v2342
  %v2348 = vsub.f32 %v2322, %v2343
  %v2349 = vsub.f32 %v2323, %v2344
  %v2350 = vmul.f32 %v2345, %v2345
  %v2351 = vmul.f32 %v2346, %v2346
  %v2352 = vmul.f32 %v2347, %v2347
  %v2353 = vmul.f32 %v2348, %v2348
  %v2354 = vmul.f32 %v2349, %v2349
  %v2355 = vsel %vm133, %v2350, 0.0
  %2356 = vadd.xlane.f32.xlu0 %v2355
  %v2357 = vpop.xlane.xlu0 %2356
  %v2358 = vsel %vm133, %v2351, 0.0
  %2359 = vadd.xlane.f32.xlu0 %v2358
  %v2360 = vpop.xlane.xlu0 %2359
  %v2361 = vsel %vm133, %v2352, 0.0
  %2362 = vadd.xlane.f32.xlu0 %v2361
  %v2363 = vpop.xlane.xlu0 %2362
  %v2364 = vsel %vm133, %v2353, 0.0
  %2365 = vadd.xlane.f32.xlu0 %v2364
  %v2366 = vpop.xlane.xlu0 %2365
  %v2367 = vsel %vm146, %v2354, 0.0
  %2368 = vadd.xlane.f32.xlu0 %v2367
  %v2369 = vpop.xlane.xlu0 %2368
  %v2370 = vmul.f32 %v2357, %v156
  %v2371 = vmul.f32 %v2360, %v156
  %v2372 = vmul.f32 %v2363, %v156
  %v2373 = vmul.f32 %v2366, %v156
  %v2374 = vmul.f32 %v2369, %v156
  %v2375 = vadd.f32 %v2370, 1e-12
  %v2376 = vadd.f32 %v2371, 1e-12
  %v2377 = vadd.f32 %v2372, 1e-12
  %v2378 = vadd.f32 %v2373, 1e-12
  %v2379 = vadd.f32 %v2374, 1e-12
  %v2380 = vrsqrt.pop %v2375
  %v2381 = vmul.f32 %v2380, %v2375
  %v2382 = vmul.f32 %v2381, %v2380
  %v2383 = vmul.f32 0.5, %v2382
  %v2384 = vsub.f32 1.5, %v2383
  %v2385 = vmul.f32 %v2380, %v2384
  %vm2386 = vweird.f32 %v2375
  %vm2387 = vweird.f32 %v2380
  %vm2388 = vmor %vm2386, %vm2387
  %v2389 = vsel %vm2388, %v2380, %v2385
  %v2390 = vrsqrt.pop %v2376
  %v2391 = vmul.f32 %v2390, %v2376
  %v2392 = vmul.f32 %v2391, %v2390
  %v2393 = vmul.f32 0.5, %v2392
  %v2394 = vsub.f32 1.5, %v2393
  %v2395 = vmul.f32 %v2390, %v2394
  %vm2396 = vweird.f32 %v2376
  %vm2397 = vweird.f32 %v2390
  %vm2398 = vmor %vm2396, %vm2397
  %v2399 = vsel %vm2398, %v2390, %v2395
  %v2400 = vrsqrt.pop %v2377
  %v2401 = vmul.f32 %v2400, %v2377
  %v2402 = vmul.f32 %v2401, %v2400
  %v2403 = vmul.f32 0.5, %v2402
  %v2404 = vsub.f32 1.5, %v2403
  %v2405 = vmul.f32 %v2400, %v2404
  %vm2406 = vweird.f32 %v2377
  %vm2407 = vweird.f32 %v2400
  %vm2408 = vmor %vm2406, %vm2407
  %v2409 = vsel %vm2408, %v2400, %v2405
  %v2410 = vrsqrt.pop %v2378
  %v2411 = vmul.f32 %v2410, %v2378
  %v2412 = vmul.f32 %v2411, %v2410
  %v2413 = vmul.f32 0.5, %v2412
  %v2414 = vsub.f32 1.5, %v2413
  %v2415 = vmul.f32 %v2410, %v2414
  %vm2416 = vweird.f32 %v2378
  %vm2417 = vweird.f32 %v2410
  %vm2418 = vmor %vm2416, %vm2417
  %v2419 = vsel %vm2418, %v2410, %v2415
  %v2420 = vrsqrt.pop %v2379
  %v2421 = vmul.f32 %v2420, %v2379
  %v2422 = vmul.f32 %v2421, %v2420
  %v2423 = vmul.f32 0.5, %v2422
  %v2424 = vsub.f32 1.5, %v2423
  %v2425 = vmul.f32 %v2420, %v2424
  %vm2426 = vweird.f32 %v2379
  %vm2427 = vweird.f32 %v2420
  %vm2428 = vmor %vm2426, %vm2427
  %v2429 = vsel %vm2428, %v2420, %v2425
  %v2430 = vmul.f32 %v2345, %v2389
  %v2431 = vmul.f32 %v2346, %v2399
  %v2432 = vmul.f32 %v2347, %v2409
  %v2433 = vmul.f32 %v2348, %v2419
  %v2434 = vmul.f32 %v2349, %v2429
  %v2435 = vperm.slane %v2324, 0
  %v2436 = vmul.f32 %v2430, %v2435
  %v2437 = vmul.f32 %v2431, %v2435
  %v2438 = vmul.f32 %v2432, %v2435
  %v2439 = vmul.f32 %v2433, %v2435
  %v2440 = vmul.f32 %v2434, %v2435
  %v2441 = vperm.slane %v2324, 1
  %v2442 = vadd.f32 %v2436, %v2441
  %v2443 = vadd.f32 %v2437, %v2441
  %v2444 = vadd.f32 %v2438, %v2441
  %v2445 = vadd.f32 %v2439, %v2441
  %v2446 = vadd.f32 %v2440, %v2441
  %v2447 = vld [vmem:[%s13] sm:$0xff]
  %v2448 = vld [vmem:[%s13 + $0x8] sm:$0xff]
  %v2449 = vld [vmem:[%s13 + $0x10] sm:$0xff]
  %v2450 = vld [vmem:[%s13 + $0x18] sm:$0xff]
  %v2451 = vld [vmem:[%s14] sm:$0x1]
  %v2453 = vperm.slane %v2451, 0
  %v2456 = vsel %vm133, %v2442, 0
  %v2459 = vsel %vm133, %v2443, 0
  %v2462 = vsel %vm133, %v2444, 0
  %v2465 = vsel %vm133, %v2445, 0
  %v2468 = vsel %vm133, %v2446, 0
  %2470 = vmatpush.msra.mxu0 0.0
  %2471 = vmatpush.msra.mxu0 0.0
  %2472 = vmatpush.msra.mxu0 0.0
  %2473 = vmatpush.msra.mxu0 0.0
  %2474 = vmatpush.msra.mxu0 0.0
  %2475 = vmatpush.msra.mxu0 0.0
  %2476 = vmatpush.msra.mxu0 0.0
  %2477 = vmatpush.msra.mxu0 0.0
  %2478 = vmatpush.msra.mxu0 0.0
  %2479 = vmatpush.msra.mxu0 0.0
  %2480 = vmatpush.msra.mxu0 0.0
  %2481 = vmatpush.msra.mxu0 0.0
  %2482 = vmatpush.msra.mxu0 %v2450
  %2483 = vmatpush.msra.mxu0 %v2449
  %2484 = vmatpush.msra.mxu0 %v2448
  %2485 = vmatpush.msra.mxu0 %v2447
  %2486 = vmatmul.f32.gmra.mxu0 %v2456
  %v2487 = vpop.f32.mrf.mxu0
  %v2488 = vadd.f32 %v2453, %v2487
  %2489 = vmatmul.f32.gmra.mxu0 %v2459
  %v2490 = vpop.f32.mrf.mxu0
  %v2491 = vadd.f32 %v2453, %v2490
  %2492 = vmatmul.f32.gmra.mxu0 %v2462
  %v2493 = vpop.f32.mrf.mxu0
  %v2494 = vadd.f32 %v2453, %v2493
  %2495 = vmatmul.f32.gmra.mxu0 %v2465
  %v2496 = vpop.f32.mrf.mxu0
  %v2497 = vadd.f32 %v2453, %v2496
  %2498 = vmatmul.f32.gmra.mxu0 %v2468
  %v2499 = vpop.f32.mrf.mxu0
  %v2500 = vadd.f32 %v2453, %v2499
  %2501 = vdwg.mxu0
  %2502 = vst [vmem:[%s15] sm:$0xff] %v2488
  %2503 = vst [vmem:[%s15 + $0x8] sm:$0xff] %v2491
  %2504 = vst [vmem:[%s15 + $0x10] sm:$0xff] %v2494
  %2505 = vst [vmem:[%s15 + $0x18] sm:$0xff] %v2497
  %2506 = vst [vmem:[%s15 + $0x20] sm:$0x3] %v2500
  // Predicated region
  $region62: #{segmented_vit_forward.1} parent=0 // pred_check
    _
  $region63: #{segmented_vit_forward.1} parent=0 // pred_check_branch
    %2508 = sbr.rel (0) target = $region65
  $region64: #{segmented_vit_forward.1} parent=0 // pred_region
    _
  $region65: #{segmented_vit_forward.1} parent=0 // pred_fallthru
    _
  // Predicated region
  $region66: #{segmented_vit_forward.1} parent=0 // pred_check
    _
  $region67: #{segmented_vit_forward.1} parent=0 // pred_check_branch
    %2510 = sbr.rel (0) target = $region69
  $region68: #{segmented_vit_forward.1} parent=0 // pred_region
    _
  $region69: #{segmented_vit_forward.1} parent=0 // pred_fallthru
    _

</llo_original>
